<compile_context>
chip_gen: v7x
topology: tpu7x:2x2x1
jax: 0.10.0
libtpu: 0.0.40
codegen_flags: <defaults>
</compile_context>

<pallas_src>
import functools

import jax
import jax.numpy as jnp
from jax import lax
from jax.experimental import pallas as pl
from jax.experimental.pallas import tpu as pltpu

# Fits comfortably inside v7x's 64 MiB physical VMEM; also valid on v5e/v6e (128 MiB).
_VMEM_LIMIT_BYTES = 48 * 1024 * 1024
_BLOCK_M = 256  # row tile for the QKV GEMM (f32); clamped to M for small inputs.


# ---------------------------------------------------------------------------
# Kernel 1: QKV projection.  Output (3, M, E), heads contiguous (head-major).
# ---------------------------------------------------------------------------
def _qkv_kernel(x_ref, w_ref, b_ref, o_ref):
    # x: (TM, E)  w: (1, E, E)  b: (1, 1, E)  ->  o: (1, TM, E)
    acc = jnp.dot(x_ref[...], w_ref[0], preferred_element_type=jnp.float32)
    o_ref[0] = (acc + b_ref[0]).astype(o_ref.dtype)


def qkv_projection(x2d, w_r, b_r, *, block_m=_BLOCK_M):
    M, E = x2d.shape
    tm = M if M <= block_m else block_m  # small M: full block (satisfies (8,128) rule)
    grid = (3, pl.cdiv(M, tm))           # m innermost: x tile streams, weight stays put
    return pl.pallas_call(
        _qkv_kernel,
        out_shape=jax.ShapeDtypeStruct((3, M, E), x2d.dtype),
        grid=grid,
        in_specs=[
            pl.BlockSpec((tm, E), lambda s, m: (m, 0)),        # activations
            pl.BlockSpec((1, E, E), lambda s, m: (s, 0, 0)),   # per-{q,k,v} weight
            pl.BlockSpec((1, 1, E), lambda s, m: (s, 0, 0)),   # per-{q,k,v} bias
        ],
        out_specs=pl.BlockSpec((1, tm, E), lambda s, m: (s, m, 0)),  # lane-dense
        compiler_params=pltpu.CompilerParams(
            dimension_semantics=("parallel", "parallel"),
            vmem_limit_bytes=_VMEM_LIMIT_BYTES),
    )(x2d, w_r, b_r)


# ---------------------------------------------------------------------------
# Kernel 2: per-batch attention with fused output projection.
# ---------------------------------------------------------------------------
def _attn_proj_kernel(qkv_ref, wp_ref, bp_ref, o_ref, *,
                      num_heads, head_dim, inv_scale):
    # qkv: (3, 1, N, E)  wp: (E, E)  bp: (1, E)  ->  o: (1, N, E)
    N = qkv_ref.shape[2]
    E = qkv_ref.shape[3]

    # Full-lane loads of q/k/v for this batch (heads are contiguous columns).
    q = qkv_ref[0, 0]   # (N, E)
    k = qkv_ref[1, 0]
    v = qkv_ref[2, 0]

    acc = jnp.zeros((N, E), jnp.float32)
    for h in range(num_heads):                      # static, unrolled (H is small)
        lo = h * head_dim
        hi = lo + head_dim
        q_h = q[:, lo:hi]                           # (N, D) static lane slices
        k_h = k[:, lo:hi]
        v_h = v[:, lo:hi]

        # energy = q_h @ k_h^T : contract last dims of both; no k transpose materialized.
        energy = lax.dot_general(q_h, k_h, (((1,), (1,)), ((), ())),
                                 preferred_element_type=jnp.float32)   # (N, N)

        # Numerically stable softmax; denominator via EUP reciprocal (~1e-3 rel).
        m = jnp.max(energy, axis=-1, keepdims=True)
        p = jnp.exp(energy - m)
        att = p * pl.reciprocal(jnp.sum(p, axis=-1, keepdims=True), approx=True)

        # (att @ v_h) projected through this head's W_proj rows, accumulated in f32.
        o_h = jnp.dot(att.astype(v_h.dtype), v_h,
                      preferred_element_type=jnp.float32)              # (N, D)
        acc = acc + jnp.dot(o_h.astype(wp_ref.dtype), wp_ref[lo:hi, :],
                            preferred_element_type=jnp.float32)        # (N, E)

    # The module divides att by sqrt(emb_size) AFTER the softmax; that constant
    # commutes with @V, head-concat and @W_proj, so apply it once here (exact).
    out = acc * inv_scale + bp_ref[...]
    o_ref[0] = out.astype(o_ref.dtype)


def attention_output_projection(qkv, w_proj, b_proj, *, num_heads, emb_size):
    _, B, N, E = qkv.shape
    D = E // num_heads
    inv_scale = 1.0 / (float(emb_size) ** 0.5)
    kern = functools.partial(_attn_proj_kernel, num_heads=num_heads,
                             head_dim=D, inv_scale=inv_scale)
    return pl.pallas_call(
        kern,
        out_shape=jax.ShapeDtypeStruct((B, N, E), qkv.dtype),
        grid=(B,),
        in_specs=[
            pl.BlockSpec((3, 1, N, E), lambda b: (0, b, 0, 0)),  # q/k/v for batch b
            pl.BlockSpec((E, E), lambda b: (0, 0)),              # W_proj (stays resident)
            pl.BlockSpec((1, E), lambda b: (0, 0)),              # b_proj
        ],
        out_specs=pl.BlockSpec((1, N, E), lambda b: (b, 0, 0)),  # lane-dense (N, E)
        compiler_params=pltpu.CompilerParams(
            dimension_semantics=("parallel",),
            vmem_limit_bytes=_VMEM_LIMIT_BYTES),
    )(qkv, w_proj, b_proj.reshape(1, E))


# ---------------------------------------------------------------------------
# Full forward.  Weights use the x @ W (+ b) convention: w_qkv (E, 3E), w_proj (E, E).
# ---------------------------------------------------------------------------
def multi_head_attention(x, w_qkv, b_qkv, w_proj, b_proj, *, num_heads, emb_size):
    B, N, E = x.shape
    H = num_heads
    D = E // H

    # De-interleave the QKV weight columns at trace time (weights only; activations
    # are never rearranged in HBM).  torch packs the 3E axis as (h, d, qkv), i.e.
    # column = h*(D*3) + d*3 + s  ->  new layout [s][h*D + d]  (head-major per s).
    w_r = jnp.transpose(w_qkv.reshape(E, H, D, 3), (3, 0, 1, 2)).reshape(3, E, E)
    b_r = jnp.transpose(b_qkv.reshape(H, D, 3), (2, 0, 1)).reshape(3, 1, E)

    qkv = qkv_projection(x.reshape(B * N, E), w_r, b_r)   # (3, B*N, E)
    qkv = qkv.reshape(3, B, N, E)                          # free leading-dim split

    return attention_output_projection(qkv, w_proj, b_proj,
                                       num_heads=H, emb_size=emb_size)


if __name__ == "__main__":
    # Small shapes consistent with the module: (B, N, E) with E = H * D.
    B, N = 2, 8
    emb_size, num_heads = 32, 4

    key = jax.random.PRNGKey(0)
    kx, kw1, kb1, kw2, kb2 = jax.random.split(key, 5)

    x = jax.random.normal(kx, (B, N, emb_size), dtype=jnp.float32)

    # Deterministic nn.Linear-style init: U(-1/sqrt(fan_in), 1/sqrt(fan_in)).
    bound = 1.0 / (emb_size ** 0.5)
    w_qkv = jax.random.uniform(kw1, (emb_size, 3 * emb_size), jnp.float32, -bound, bound)
    b_qkv = jax.random.uniform(kb1, (3 * emb_size,), jnp.float32, -bound, bound)
    w_proj = jax.random.uniform(kw2, (emb_size, emb_size), jnp.float32, -bound, bound)
    b_proj = jax.random.uniform(kb2, (emb_size,), jnp.float32, -bound, bound)

    mha = jax.jit(functools.partial(multi_head_attention,
                                    num_heads=num_heads, emb_size=emb_size))
    out = mha(x, w_qkv, b_qkv, w_proj, b_proj)
    jax.block_until_ready(out)
    assert out.shape == (B, N, emb_size)
    print("KERNEL_OK")
</pallas_src>

<mosaic_0001>
module attributes {stable_mosaic.version = 11 : i64} {
  func.func @_qkv_kernel(%arg0: i32, %arg1: i32, %arg2: memref<16x32xf32, #tpu.memory_space<vmem>>, %arg3: memref<1x32x32xf32, #tpu.memory_space<vmem>>, %arg4: memref<1x1x32xf32, #tpu.memory_space<vmem>>, %arg5: memref<1x16x32xf32, #tpu.memory_space<vmem>>) attributes {dimension_semantics = [#tpu.dimension_semantics<parallel>, #tpu.dimension_semantics<parallel>], iteration_bounds = array<i64: 3, 1>, scalar_prefetch = 0 : i64, scratch_operands = 0 : i64, tpu.core_type = #tpu.core_type<tc>, window_params = [{transform_indices = @transform_0, window_bounds = array<i64: 16, 32>}, {transform_indices = @transform_1, window_bounds = array<i64: 1, 32, 32>}, {transform_indices = @transform_2, window_bounds = array<i64: 1, 1, 32>}, {transform_indices = @transform_3, window_bounds = array<i64: 1, 16, 32>}]} {
    %c0 = arith.constant 0 : index
    %c0_0 = arith.constant 0 : index
    %0 = vector.load %arg2[%c0, %c0_0] : memref<16x32xf32, #tpu.memory_space<vmem>>, vector<16x32xf32>
    %c0_1 = arith.constant 0 : index
    %c0_2 = arith.constant 0 : index
    %c0_3 = arith.constant 0 : index
    %1 = vector.load %arg3[%c0_1, %c0_2, %c0_3] : memref<1x32x32xf32, #tpu.memory_space<vmem>>, vector<1x32x32xf32>
    %2 = vector.shape_cast %1 : vector<1x32x32xf32> to vector<32x32xf32>
    %cst = arith.constant dense<0.000000e+00> : vector<16x32xf32>
    %3 = tpu.matmul %0, %2, %cst {dimension_numbers = #tpu.dot_dimension_numbers<[1], [0], [0], [1], [0, 0, 1, 1], [], []>} : vector<16x32xf32>, vector<32x32xf32>, vector<16x32xf32> -> vector<16x32xf32>
    %c0_4 = arith.constant 0 : index
    %c0_5 = arith.constant 0 : index
    %c0_6 = arith.constant 0 : index
    %4 = vector.load %arg4[%c0_4, %c0_5, %c0_6] : memref<1x1x32xf32, #tpu.memory_space<vmem>>, vector<1x1x32xf32>
    %5 = vector.shape_cast %4 : vector<1x1x32xf32> to vector<1x32xf32>
    %6 = vector.broadcast %5 : vector<1x32xf32> to vector<16x32xf32>
    %7 = arith.addf %3, %6 : vector<16x32xf32>
    %c0_7 = arith.constant 0 : index
    %c0_8 = arith.constant 0 : index
    %c0_9 = arith.constant 0 : index
    %8 = vector.load %arg5[%c0_7, %c0_8, %c0_9] : memref<1x16x32xf32, #tpu.memory_space<vmem>>, vector<1x16x32xf32>
    %9 = vector.shape_cast %8 : vector<1x16x32xf32> to vector<16x32xf32>
    %10 = vector.shape_cast %7 : vector<16x32xf32> to vector<1x16x32xf32>
    tpu.vector_store %arg5[%c0_7, %c0_8, %c0_9], %10 {strides = array<i32>} : memref<1x16x32xf32, #tpu.memory_space<vmem>>, vector<1x16x32xf32>,
    return
  }
  func.func @transform_0(%arg0: i32, %arg1: i32) -> (i32, i32) {
    %c0_i32 = arith.constant 0 : i32
    %c0_i32_0 = arith.constant 0 : i32
    return %arg1, %c0_i32 : i32, i32
  }
  func.func @transform_1(%arg0: i32, %arg1: i32) -> (i32, i32, i32) {
    %c0_i32 = arith.constant 0 : i32
    %c0_i32_0 = arith.constant 0 : i32
    %c0_i32_1 = arith.constant 0 : i32
    return %arg0, %c0_i32, %c0_i32_0 : i32, i32, i32
  }
  func.func @transform_2(%arg0: i32, %arg1: i32) -> (i32, i32, i32) {
    %c0_i32 = arith.constant 0 : i32
    %c0_i32_0 = arith.constant 0 : i32
    %c0_i32_1 = arith.constant 0 : i32
    return %arg0, %c0_i32, %c0_i32_0 : i32, i32, i32
  }
  func.func @transform_3(%arg0: i32, %arg1: i32) -> (i32, i32, i32) {
    %c0_i32 = arith.constant 0 : i32
    %c0_i32_0 = arith.constant 0 : i32
    return %arg0, %arg1, %c0_i32 : i32, i32, i32
  }
}

module attributes {stable_mosaic.version = 11 : i64} {
  func.func @_attn_proj_kernel(%arg0: i32, %arg1: memref<3x1x8x32xf32, #tpu.memory_space<vmem>>, %arg2: memref<32x32xf32, #tpu.memory_space<vmem>>, %arg3: memref<1x32xf32, #tpu.memory_space<vmem>>, %arg4: memref<1x8x32xf32, #tpu.memory_space<vmem>>) attributes {dimension_semantics = [#tpu.dimension_semantics<parallel>], iteration_bounds = array<i64: 2>, scalar_prefetch = 0 : i64, scratch_operands = 0 : i64, tpu.core_type = #tpu.core_type<tc>, window_params = [{transform_indices = @transform_0, window_bounds = array<i64: 3, 1, 8, 32>}, {pipeline_mode = #tpu.pipeline_mode<synchronous>, transform_indices = @transform_1, window_bounds = array<i64: 32, 32>}, {pipeline_mode = #tpu.pipeline_mode<synchronous>, transform_indices = @transform_2, window_bounds = array<i64: 1, 32>}, {transform_indices = @transform_3, window_bounds = array<i64: 1, 8, 32>}]} {
    %c0 = arith.constant 0 : index
    %c0_0 = arith.constant 0 : index
    %c0_1 = arith.constant 0 : index
    %c0_2 = arith.constant 0 : index
    %0 = vector.load %arg1[%c0, %c0_0, %c0_1, %c0_2] : memref<3x1x8x32xf32, #tpu.memory_space<vmem>>, vector<1x1x8x32xf32>
    %1 = vector.shape_cast %0 : vector<1x1x8x32xf32> to vector<8x32xf32>
    %c1 = arith.constant 1 : index
    %c0_3 = arith.constant 0 : index
    %c0_4 = arith.constant 0 : index
    %c0_5 = arith.constant 0 : index
    %2 = vector.load %arg1[%c1, %c0_3, %c0_4, %c0_5] : memref<3x1x8x32xf32, #tpu.memory_space<vmem>>, vector<1x1x8x32xf32>
    %3 = vector.shape_cast %2 : vector<1x1x8x32xf32> to vector<8x32xf32>
    %c2 = arith.constant 2 : index
    %c0_6 = arith.constant 0 : index
    %c0_7 = arith.constant 0 : index
    %c0_8 = arith.constant 0 : index
    %4 = vector.load %arg1[%c2, %c0_6, %c0_7, %c0_8] : memref<3x1x8x32xf32, #tpu.memory_space<vmem>>, vector<1x1x8x32xf32>
    %5 = vector.shape_cast %4 : vector<1x1x8x32xf32> to vector<8x32xf32>
    %cst = arith.constant 0.000000e+00 : f32
    %6 = vector.broadcast %cst : f32 to vector<8x32xf32>
    %7 = vector.extract_strided_slice %1 {offsets = [0, 0], sizes = [8, 8], strides = [1, 1]} : vector<8x32xf32> to vector<8x8xf32>
    %8 = vector.extract_strided_slice %3 {offsets = [0, 0], sizes = [8, 8], strides = [1, 1]} : vector<8x32xf32> to vector<8x8xf32>
    %9 = vector.extract_strided_slice %5 {offsets = [0, 0], sizes = [8, 8], strides = [1, 1]} : vector<8x32xf32> to vector<8x8xf32>
    %cst_9 = arith.constant dense<0.000000e+00> : vector<8x8xf32>
    %10 = tpu.matmul %7, %8, %cst_9 {dimension_numbers = #tpu.dot_dimension_numbers<[1], [1], [0], [0], [0, 0, 1, 0], [], []>} : vector<8x8xf32>, vector<8x8xf32>, vector<8x8xf32> -> vector<8x8xf32>
    %cst_10 = arith.constant dense<0xFF800000> : vector<8xf32>
    %11 = vector.multi_reduction <maximumf>, %10, %cst_10 [1] : vector<8x8xf32> to vector<8xf32>
    %12 = vector.shape_cast %11 : vector<8xf32> to vector<8x1xf32>
    %13 = vector.broadcast %12 : vector<8x1xf32> to vector<8x8xf32>
    %14 = arith.subf %10, %13 : vector<8x8xf32>
    %15 = math.exp %14 : vector<8x8xf32>
    %cst_11 = arith.constant dense<0.000000e+00> : vector<8xf32>
    %16 = vector.multi_reduction <add>, %15, %cst_11 [1] : vector<8x8xf32> to vector<8xf32>
    %17 = vector.shape_cast %16 : vector<8xf32> to vector<8x1xf32>
    %18 = tpu.reciprocal %17 {approx = true} : vector<8x1xf32> -> vector<8x1xf32>
    %19 = vector.broadcast %18 : vector<8x1xf32> to vector<8x8xf32>
    %20 = arith.mulf %15, %19 : vector<8x8xf32>
    %cst_12 = arith.constant dense<0.000000e+00> : vector<8x8xf32>
    %21 = tpu.matmul %20, %9, %cst_12 {dimension_numbers = #tpu.dot_dimension_numbers<[1], [0], [0], [1], [0, 0, 1, 1], [], []>} : vector<8x8xf32>, vector<8x8xf32>, vector<8x8xf32> -> vector<8x8xf32>
    %c0_13 = arith.constant 0 : index
    %c0_14 = arith.constant 0 : index
    %22 = vector.load %arg2[%c0_13, %c0_14] : memref<32x32xf32, #tpu.memory_space<vmem>>, vector<8x32xf32>
    %cst_15 = arith.constant dense<0.000000e+00> : vector<8x32xf32>
    %23 = tpu.matmul %21, %22, %cst_15 {dimension_numbers = #tpu.dot_dimension_numbers<[1], [0], [0], [1], [0, 0, 1, 1], [], []>} : vector<8x8xf32>, vector<8x32xf32>, vector<8x32xf32> -> vector<8x32xf32>
    %24 = arith.addf %6, %23 : vector<8x32xf32>
    %25 = vector.extract_strided_slice %1 {offsets = [0, 8], sizes = [8, 8], strides = [1, 1]} : vector<8x32xf32> to vector<8x8xf32>
    %26 = vector.extract_strided_slice %3 {offsets = [0, 8], sizes = [8, 8], strides = [1, 1]} : vector<8x32xf32> to vector<8x8xf32>
    %27 = vector.extract_strided_slice %5 {offsets = [0, 8], sizes = [8, 8], strides = [1, 1]} : vector<8x32xf32> to vector<8x8xf32>
    %cst_16 = arith.constant dense<0.000000e+00> : vector<8x8xf32>
    %28 = tpu.matmul %25, %26, %cst_16 {dimension_numbers = #tpu.dot_dimension_numbers<[1], [1], [0], [0], [0, 0, 1, 0], [], []>} : vector<8x8xf32>, vector<8x8xf32>, vector<8x8xf32> -> vector<8x8xf32>
    %cst_17 = arith.constant dense<0xFF800000> : vector<8xf32>
    %29 = vector.multi_reduction <maximumf>, %28, %cst_17 [1] : vector<8x8xf32> to vector<8xf32>
    %30 = vector.shape_cast %29 : vector<8xf32> to vector<8x1xf32>
    %31 = vector.broadcast %30 : vector<8x1xf32> to vector<8x8xf32>
    %32 = arith.subf %28, %31 : vector<8x8xf32>
    %33 = math.exp %32 : vector<8x8xf32>
    %cst_18 = arith.constant dense<0.000000e+00> : vector<8xf32>
    %34 = vector.multi_reduction <add>, %33, %cst_18 [1] : vector<8x8xf32> to vector<8xf32>
    %35 = vector.shape_cast %34 : vector<8xf32> to vector<8x1xf32>
    %36 = tpu.reciprocal %35 {approx = true} : vector<8x1xf32> -> vector<8x1xf32>
    %37 = vector.broadcast %36 : vector<8x1xf32> to vector<8x8xf32>
    %38 = arith.mulf %33, %37 : vector<8x8xf32>
    %cst_19 = arith.constant dense<0.000000e+00> : vector<8x8xf32>
    %39 = tpu.matmul %38, %27, %cst_19 {dimension_numbers = #tpu.dot_dimension_numbers<[1], [0], [0], [1], [0, 0, 1, 1], [], []>} : vector<8x8xf32>, vector<8x8xf32>, vector<8x8xf32> -> vector<8x8xf32>
    %c8 = arith.constant 8 : index
    %c0_20 = arith.constant 0 : index
    %40 = vector.load %arg2[%c8, %c0_20] : memref<32x32xf32, #tpu.memory_space<vmem>>, vector<8x32xf32>
    %cst_21 = arith.constant dense<0.000000e+00> : vector<8x32xf32>
    %41 = tpu.matmul %39, %40, %cst_21 {dimension_numbers = #tpu.dot_dimension_numbers<[1], [0], [0], [1], [0, 0, 1, 1], [], []>} : vector<8x8xf32>, vector<8x32xf32>, vector<8x32xf32> -> vector<8x32xf32>
    %42 = arith.addf %24, %41 : vector<8x32xf32>
    %43 = vector.extract_strided_slice %1 {offsets = [0, 16], sizes = [8, 8], strides = [1, 1]} : vector<8x32xf32> to vector<8x8xf32>
    %44 = vector.extract_strided_slice %3 {offsets = [0, 16], sizes = [8, 8], strides = [1, 1]} : vector<8x32xf32> to vector<8x8xf32>
    %45 = vector.extract_strided_slice %5 {offsets = [0, 16], sizes = [8, 8], strides = [1, 1]} : vector<8x32xf32> to vector<8x8xf32>
    %cst_22 = arith.constant dense<0.000000e+00> : vector<8x8xf32>
    %46 = tpu.matmul %43, %44, %cst_22 {dimension_numbers = #tpu.dot_dimension_numbers<[1], [1], [0], [0], [0, 0, 1, 0], [], []>} : vector<8x8xf32>, vector<8x8xf32>, vector<8x8xf32> -> vector<8x8xf32>
    %cst_23 = arith.constant dense<0xFF800000> : vector<8xf32>
    %47 = vector.multi_reduction <maximumf>, %46, %cst_23 [1] : vector<8x8xf32> to vector<8xf32>
    %48 = vector.shape_cast %47 : vector<8xf32> to vector<8x1xf32>
    %49 = vector.broadcast %48 : vector<8x1xf32> to vector<8x8xf32>
    %50 = arith.subf %46, %49 : vector<8x8xf32>
    %51 = math.exp %50 : vector<8x8xf32>
    %cst_24 = arith.constant dense<0.000000e+00> : vector<8xf32>
    %52 = vector.multi_reduction <add>, %51, %cst_24 [1] : vector<8x8xf32> to vector<8xf32>
    %53 = vector.shape_cast %52 : vector<8xf32> to vector<8x1xf32>
    %54 = tpu.reciprocal %53 {approx = true} : vector<8x1xf32> -> vector<8x1xf32>
    %55 = vector.broadcast %54 : vector<8x1xf32> to vector<8x8xf32>
    %56 = arith.mulf %51, %55 : vector<8x8xf32>
    %cst_25 = arith.constant dense<0.000000e+00> : vector<8x8xf32>
    %57 = tpu.matmul %56, %45, %cst_25 {dimension_numbers = #tpu.dot_dimension_numbers<[1], [0], [0], [1], [0, 0, 1, 1], [], []>} : vector<8x8xf32>, vector<8x8xf32>, vector<8x8xf32> -> vector<8x8xf32>
    %c16 = arith.constant 16 : index
    %c0_26 = arith.constant 0 : index
    %58 = vector.load %arg2[%c16, %c0_26] : memref<32x32xf32, #tpu.memory_space<vmem>>, vector<8x32xf32>
    %cst_27 = arith.constant dense<0.000000e+00> : vector<8x32xf32>
    %59 = tpu.matmul %57, %58, %cst_27 {dimension_numbers = #tpu.dot_dimension_numbers<[1], [0], [0], [1], [0, 0, 1, 1], [], []>} : vector<8x8xf32>, vector<8x32xf32>, vector<8x32xf32> -> vector<8x32xf32>
    %60 = arith.addf %42, %59 : vector<8x32xf32>
    %61 = vector.extract_strided_slice %1 {offsets = [0, 24], sizes = [8, 8], strides = [1, 1]} : vector<8x32xf32> to vector<8x8xf32>
    %62 = vector.extract_strided_slice %3 {offsets = [0, 24], sizes = [8, 8], strides = [1, 1]} : vector<8x32xf32> to vector<8x8xf32>
    %63 = vector.extract_strided_slice %5 {offsets = [0, 24], sizes = [8, 8], strides = [1, 1]} : vector<8x32xf32> to vector<8x8xf32>
    %cst_28 = arith.constant dense<0.000000e+00> : vector<8x8xf32>
    %64 = tpu.matmul %61, %62, %cst_28 {dimension_numbers = #tpu.dot_dimension_numbers<[1], [1], [0], [0], [0, 0, 1, 0], [], []>} : vector<8x8xf32>, vector<8x8xf32>, vector<8x8xf32> -> vector<8x8xf32>
    %cst_29 = arith.constant dense<0xFF800000> : vector<8xf32>
    %65 = vector.multi_reduction <maximumf>, %64, %cst_29 [1] : vector<8x8xf32> to vector<8xf32>
    %66 = vector.shape_cast %65 : vector<8xf32> to vector<8x1xf32>
    %67 = vector.broadcast %66 : vector<8x1xf32> to vector<8x8xf32>
    %68 = arith.subf %64, %67 : vector<8x8xf32>
    %69 = math.exp %68 : vector<8x8xf32>
    %cst_30 = arith.constant dense<0.000000e+00> : vector<8xf32>
    %70 = vector.multi_reduction <add>, %69, %cst_30 [1] : vector<8x8xf32> to vector<8xf32>
    %71 = vector.shape_cast %70 : vector<8xf32> to vector<8x1xf32>
    %72 = tpu.reciprocal %71 {approx = true} : vector<8x1xf32> -> vector<8x1xf32>
    %73 = vector.broadcast %72 : vector<8x1xf32> to vector<8x8xf32>
    %74 = arith.mulf %69, %73 : vector<8x8xf32>
    %cst_31 = arith.constant dense<0.000000e+00> : vector<8x8xf32>
    %75 = tpu.matmul %74, %63, %cst_31 {dimension_numbers = #tpu.dot_dimension_numbers<[1], [0], [0], [1], [0, 0, 1, 1], [], []>} : vector<8x8xf32>, vector<8x8xf32>, vector<8x8xf32> -> vector<8x8xf32>
    %c24 = arith.constant 24 : index
    %c0_32 = arith.constant 0 : index
    %76 = vector.load %arg2[%c24, %c0_32] : memref<32x32xf32, #tpu.memory_space<vmem>>, vector<8x32xf32>
    %cst_33 = arith.constant dense<0.000000e+00> : vector<8x32xf32>
    %77 = tpu.matmul %75, %76, %cst_33 {dimension_numbers = #tpu.dot_dimension_numbers<[1], [0], [0], [1], [0, 0, 1, 1], [], []>} : vector<8x8xf32>, vector<8x32xf32>, vector<8x32xf32> -> vector<8x32xf32>
    %78 = arith.addf %60, %77 : vector<8x32xf32>
    %cst_34 = arith.constant 0.176776692 : f32
    %79 = vector.broadcast %cst_34 : f32 to vector<8x32xf32>
    %80 = arith.mulf %78, %79 : vector<8x32xf32>
    %c0_35 = arith.constant 0 : index
    %c0_36 = arith.constant 0 : index
    %81 = vector.load %arg3[%c0_35, %c0_36] : memref<1x32xf32, #tpu.memory_space<vmem>>, vector<1x32xf32>
    %82 = vector.broadcast %81 : vector<1x32xf32> to vector<8x32xf32>
    %83 = arith.addf %80, %82 : vector<8x32xf32>
    %c0_37 = arith.constant 0 : index
    %c0_38 = arith.constant 0 : index
    %c0_39 = arith.constant 0 : index
    %84 = vector.load %arg4[%c0_37, %c0_38, %c0_39] : memref<1x8x32xf32, #tpu.memory_space<vmem>>, vector<1x8x32xf32>
    %85 = vector.shape_cast %84 : vector<1x8x32xf32> to vector<8x32xf32>
    %86 = vector.shape_cast %83 : vector<8x32xf32> to vector<1x8x32xf32>
    tpu.vector_store %arg4[%c0_37, %c0_38, %c0_39], %86 {strides = array<i32>} : memref<1x8x32xf32, #tpu.memory_space<vmem>>, vector<1x8x32xf32>,
    return
  }
  func.func @transform_0(%arg0: i32) -> (i32, i32, i32, i32) {
    %c0_i32 = arith.constant 0 : i32
    %c0_i32_0 = arith.constant 0 : i32
    %c0_i32_1 = arith.constant 0 : i32
    %c0_i32_2 = arith.constant 0 : i32
    return %c0_i32, %arg0, %c0_i32_0, %c0_i32_1 : i32, i32, i32, i32
  }
  func.func @transform_1(%arg0: i32) -> (i32, i32) {
    %c0_i32 = arith.constant 0 : i32
    %c0_i32_0 = arith.constant 0 : i32
    %c0_i32_1 = arith.constant 0 : i32
    return %c0_i32, %c0_i32_0 : i32, i32
  }
  func.func @transform_2(%arg0: i32) -> (i32, i32) {
    %c0_i32 = arith.constant 0 : i32
    %c0_i32_0 = arith.constant 0 : i32
    %c0_i32_1 = arith.constant 0 : i32
    return %c0_i32, %c0_i32_0 : i32, i32
  }
  func.func @transform_3(%arg0: i32) -> (i32, i32, i32) {
    %c0_i32 = arith.constant 0 : i32
    %c0_i32_0 = arith.constant 0 : i32
    %c0_i32_1 = arith.constant 0 : i32
    return %arg0, %c0_i32, %c0_i32_0 : i32, i32, i32
  }
}

</mosaic_0001>

<llo_original>
// kernel: multi_head_attention.2
$region0: #{multi_head_attention.2}
  #allocation0 [shape = 'u32[]', space=smem, size = 0x4, offset = 0x4, fixed_abs, tag = 'smem constant byte address 0x4 - core index']
  #allocation1 [shape = 'u32[144,128]{1,0:T(1,128)}', space=vmem, size = 0x12000, scoped, tag = 'internal scratch']
  %s0 = inlined_call_operand.vmem [shape: f32[16,32], index: 0, kind: input, shape index: {}]
  %s1 = inlined_call_operand.vmem [shape: f32[3,32,32], index: 1, kind: input, shape index: {}]
  %s2 = inlined_call_operand.vmem [shape: f32[3,1,32], index: 2, kind: input, shape index: {}]
  %s3 = inlined_call_operand.vmem [shape: f32[3,16,32], index: 3, kind: output, shape index: {}]
  %s4 = sld [smem:[#allocation0]]
  $region45: #{multi_head_attention.2} parent=0
    _
  %s6 = ssub.s32 1, %s4
  %s7 = scalar_select 0, %s6, %s4
  loop: start=0, step=1, limit=5
  $region2: #{multi_head_attention.2} parent=0 // loop_pre_header
    _
  $region3: #{multi_head_attention.2} parent=0 // loop_header
    %s9 = sphi 0, %s13
    %p10 = scmp.ge.s32.totalorder %s9, 5
    %s16 = sphi 0, %s28
    %s17 = sphi 0, %s24
    %s18 = sphi 0, %s16
    %s19 = sphi 0, %s17
    %s20 = sphi 0, %s18
    %s21 = sphi 0, %s19
    %s31 = sphi 0, %s33
    %s34 = sphi 0, %s31
    %s35 = sphi 0, %s34
    %s51 = sphi 0, %s35
    %s57 = sphi 0, %s59
    %s60 = sphi 0, %s57
    %s61 = sphi 0, %s60
    %s77 = sphi 0, %s61
    %s83 = sphi 0, %s85
    %s86 = sphi 0, %s83
    %s87 = sphi 0, %s86
    %s103 = sphi 0, %s87
    %s111 = sphi 0, %s113
    %s114 = sphi 0, %s111
    %s115 = sphi 0, %s114
    %s131 = sphi 0, %s115
  $region4: #{multi_head_attention.2} parent=0 // loop_header_branch
    %12 = sbr.rel (%p10) target = $region8
  $region5: #{multi_head_attention.2} parent=0 // loop_body
    %s14 = ssub.s32 %s9, 1
    %s15 = ssub.s32 %s9, 2
    %s22 = sadd.s32 1, %s17
    %p23 = scmp.ge.s32.totalorder %s22, 1
    %s24 = scalar_select %p23, 0, %s22
    %s25 = sadd.s32 1, %s16
    %s26 = scalar_select %p23, %s25, %s16
    %p27 = scmp.ge.s32.totalorder %s26, 3
    %s28 = scalar_select %p27, 0, %s26
    %s29 = ssub.s32 %s17, %s24
    %p30 = scmp.eq.s32.totalorder %s29, 0
    %s32 = sadd.s32 %s31, 1
    %s33 = scalar_select %p30, %s31, %s32
    %p36 = pneg %p30
    %p37 = scmp.eq.s32.totalorder %s9, 2
    %p38 = por %p36, %p37
    %p39 = scmp.ne.s32.totalorder %s31, %s34
    %p40 = scmp.eq.s32.totalorder %s9, 0
    %p41 = por %p39, %p40
    %p42 = scmp.ne.s32.totalorder %s31, %s34
    %p43 = scmp.eq.s32.totalorder %s14, 2
    %p44 = por %p42, %p43
    %p45 = scmp.ne.s32.totalorder %s34, %s35
    %p46 = scmp.eq.s32.totalorder %s14, 0
    %p47 = por %p45, %p46
    %p48 = scmp.ne.s32.totalorder %s34, %s35
    %p49 = scmp.eq.s32.totalorder %s15, 2
    %p50 = por %p48, %p49
    %p52 = scmp.ne.s32.totalorder %s35, %s51
    %p53 = scmp.eq.s32.totalorder %s15, 0
    %p54 = por %p52, %p53
    %s55 = ssub.s32 %s16, %s28
    %p56 = scmp.eq.s32.totalorder %s55, 0
    %s58 = sadd.s32 %s57, 1
    %s59 = scalar_select %p56, %s57, %s58
    %p62 = pneg %p56
    %p63 = scmp.eq.s32.totalorder %s9, 2
    %p64 = por %p62, %p63
    %p65 = scmp.ne.s32.totalorder %s57, %s60
    %p66 = scmp.eq.s32.totalorder %s9, 0
    %p67 = por %p65, %p66
    %p68 = scmp.ne.s32.totalorder %s57, %s60
    %p69 = scmp.eq.s32.totalorder %s14, 2
    %p70 = por %p68, %p69
    %p71 = scmp.ne.s32.totalorder %s60, %s61
    %p72 = scmp.eq.s32.totalorder %s14, 0
    %p73 = por %p71, %p72
    %p74 = scmp.ne.s32.totalorder %s60, %s61
    %p75 = scmp.eq.s32.totalorder %s15, 2
    %p76 = por %p74, %p75
    %p78 = scmp.ne.s32.totalorder %s61, %s77
    %p79 = scmp.eq.s32.totalorder %s15, 0
    %p80 = por %p78, %p79
    %s81 = ssub.s32 %s16, %s28
    %p82 = scmp.eq.s32.totalorder %s81, 0
    %s84 = sadd.s32 %s83, 1
    %s85 = scalar_select %p82, %s83, %s84
    %p88 = pneg %p82
    %p89 = scmp.eq.s32.totalorder %s9, 2
    %p90 = por %p88, %p89
    %p91 = scmp.ne.s32.totalorder %s83, %s86
    %p92 = scmp.eq.s32.totalorder %s9, 0
    %p93 = por %p91, %p92
    %p94 = scmp.ne.s32.totalorder %s83, %s86
    %p95 = scmp.eq.s32.totalorder %s14, 2
    %p96 = por %p94, %p95
    %p97 = scmp.ne.s32.totalorder %s86, %s87
    %p98 = scmp.eq.s32.totalorder %s14, 0
    %p99 = por %p97, %p98
    %p100 = scmp.ne.s32.totalorder %s86, %s87
    %p101 = scmp.eq.s32.totalorder %s15, 2
    %p102 = por %p100, %p101
    %p104 = scmp.ne.s32.totalorder %s87, %s103
    %p105 = scmp.eq.s32.totalorder %s15, 0
    %p106 = por %p104, %p105
    %s107 = ssub.s32 %s16, %s28
    %s108 = ssub.s32 %s17, %s24
    %s109 = sor.u32 %s107, %s108
    %p110 = scmp.eq.s32.totalorder %s109, 0
    %s112 = sadd.s32 %s111, 1
    %s113 = scalar_select %p110, %s111, %s112
    %p116 = pneg %p110
    %p117 = scmp.eq.s32.totalorder %s9, 2
    %p118 = por %p116, %p117
    %p119 = scmp.ne.s32.totalorder %s111, %s114
    %p120 = scmp.eq.s32.totalorder %s9, 0
    %p121 = por %p119, %p120
    %p122 = scmp.ne.s32.totalorder %s111, %s114
    %p123 = scmp.eq.s32.totalorder %s14, 2
    %p124 = por %p122, %p123
    %p125 = scmp.ne.s32.totalorder %s114, %s115
    %p126 = scmp.eq.s32.totalorder %s14, 0
    %p127 = por %p125, %p126
    %p128 = scmp.ne.s32.totalorder %s114, %s115
    %p129 = scmp.eq.s32.totalorder %s15, 2
    %p130 = por %p128, %p129
    %p132 = scmp.ne.s32.totalorder %s115, %s131
    %p133 = scmp.eq.s32.totalorder %s15, 0
    %p134 = por %p132, %p133
    %p135 = scmp.le.s32.totalorder 1, %s9
    %p136 = scmp.lt.s32.totalorder %s9, 4
    %p137 = pnand %p135, %p136
    %p138 = pneg %p137
    // Predicated region
    $region9: #{multi_head_attention.2} parent=5 // pred_check
      _
    $region10: #{multi_head_attention.2} parent=5 // pred_check_branch
      %140 = sbr.rel (%p137) target = $region12
    $region11: #{multi_head_attention.2} parent=5 // pred_region
      %s141 = ssub.s32 %s9, 1
      // Predicated region
      $region13: #{multi_head_attention.2} parent=11 // pred_check
        %p142 = pneg %p47
      $region14: #{multi_head_attention.2} parent=11 // pred_check_branch
        %144 = sbr.rel (%p142) target = $region16
      $region15: #{multi_head_attention.2} parent=11 // pred_region
        %s145 = smul.u32 2, %s19
        %p146 = scmp.lt.s32.totalorder %s145, 1
        %s147 = scalar_select %p146, %s145, 1
        %s148 = smul.addr %s147, 8
        %s149 = scalar_lea.vmem %s0, %s148
        %s150 = smul.u32 2, %s19
      $region16: #{multi_head_attention.2} parent=11 // pred_fallthru
        _
    $region12: #{multi_head_attention.2} parent=5 // pred_fallthru
      _
    %p151 = scmp.lt.s32.totalorder %s9, 3
    // Predicated region
    $region17: #{multi_head_attention.2} parent=5 // pred_check
      %p152 = pneg %p151
    $region18: #{multi_head_attention.2} parent=5 // pred_check_branch
      %154 = sbr.rel (%p152) target = $region20
    $region19: #{multi_head_attention.2} parent=5 // pred_region
      // Predicated region
      $region21: #{multi_head_attention.2} parent=19 // pred_check
        %p155 = pneg %p67
      $region22: #{multi_head_attention.2} parent=19 // pred_check_branch
        %157 = sbr.rel (%p155) target = $region24
      $region23: #{multi_head_attention.2} parent=19 // pred_region
        %p158 = scmp.lt.s32.totalorder %s16, 2
        %s159 = scalar_select %p158, %s16, 2
        %s160 = smul.addr %s159, 4
        %s161 = smul.addr %s160, 8
        %s162 = scalar_lea.vmem %s1, %s161
      $region24: #{multi_head_attention.2} parent=19 // pred_fallthru
        _
      // Predicated region
      $region25: #{multi_head_attention.2} parent=19 // pred_check
        %p163 = pneg %p93
      $region26: #{multi_head_attention.2} parent=19 // pred_check_branch
        %165 = sbr.rel (%p163) target = $region28
      $region27: #{multi_head_attention.2} parent=19 // pred_region
        %p166 = scmp.lt.s32.totalorder %s16, 2
        %s167 = scalar_select %p166, %s16, 2
        %s168 = scalar_lea.vmem %s2, %s167
      $region28: #{multi_head_attention.2} parent=19 // pred_fallthru
        _
    $region20: #{multi_head_attention.2} parent=5 // pred_fallthru
      _
    %p169 = scmp.le.s32.totalorder 1, %s9
    %p170 = scmp.lt.s32.totalorder %s9, 4
    %p171 = pnand %p169, %p170
    %p172 = pneg %p171
    // Predicated region
    $region29: #{multi_head_attention.2} parent=5 // pred_check
      _
    $region30: #{multi_head_attention.2} parent=5 // pred_check_branch
      %174 = sbr.rel (%p171) target = $region32
    $region31: #{multi_head_attention.2} parent=5 // pred_region
      %s175 = ssub.s32 %s9, 1
      %s176 = smul.u32 2, %s19
      %p177 = scmp.lt.s32.totalorder %s176, 1
      %s178 = scalar_select %p177, %s176, 1
      %s179 = smul.addr %s178, 8
      %s180 = scalar_lea.vmem %s0, %s179
      %p181 = pneg %p47
      %p182 = pneg %p44
      %p183 = scmp.lt.s32.totalorder %s18, 2
      %s184 = scalar_select %p183, %s18, 2
      %s185 = smul.addr %s184, 4
      %s186 = smul.addr %s185, 8
      %s187 = scalar_lea.vmem %s1, %s186
      %p188 = pneg %p73
      %p189 = pneg %p70
      %p190 = scmp.lt.s32.totalorder %s18, 2
      %s191 = scalar_select %p190, %s18, 2
      %s192 = scalar_lea.vmem %s2, %s191
      %p193 = pneg %p99
      %p194 = pneg %p96
      %p195 = pneg %p127
      %p196 = pneg %p124
      %s197 = smul.u32 2, %s19
      %p198 = scmp.lt.s32.totalorder %s18, 2
      %s199 = scalar_select %p198, %s18, 2
      %p200 = scmp.lt.s32.totalorder %s197, 1
      %s201 = scalar_select %p200, %s197, 1
      %s202 = smul.addr %s199, 2
      %s203 = sadd.s32 %s201, %s202
      %s204 = smul.addr %s203, 8
      %s205 = scalar_lea.vmem %s3, %s204
      %s206 = smul.u32 2, %s19
      %p207 = scmp.lt.s32.totalorder %s206, 1
      %s208 = scalar_select %p207, %s206, 1
      %s209 = smul.addr %s208, 8
      %s210 = scalar_lea.vmem %s0, %s209
      %s211 = smul.u32 2, %s19
      %p212 = scmp.lt.s32.totalorder %s18, 2
      %s213 = scalar_select %p212, %s18, 2
      %s214 = smul.addr %s213, 4
      %s215 = smul.addr %s214, 8
      %s216 = scalar_lea.vmem %s1, %s215
      %p217 = scmp.lt.s32.totalorder %s18, 2
      %s218 = scalar_select %p217, %s18, 2
      %s219 = scalar_lea.vmem %s2, %s218
      %s220 = smul.u32 2, %s19
      %p221 = scmp.lt.s32.totalorder %s18, 2
      %s222 = scalar_select %p221, %s18, 2
      %p223 = scmp.lt.s32.totalorder %s220, 1
      %s224 = scalar_select %p223, %s220, 1
      %s225 = smul.addr %s222, 2
      %s226 = sadd.s32 %s224, %s225
      %s227 = smul.addr %s226, 8
      %s228 = scalar_lea.vmem %s3, %s227
      %s229 = smul.u32 2, %s19
      %v230 = vld [vmem:[%s210] sm:$0xff]
      %v231 = vld [vmem:[%s210 + $0x8] sm:$0xff]
      %v232 = vld [vmem:[%s216] sm:$0xff]
      %v233 = vld [vmem:[%s216 + $0x8] sm:$0xff]
      %v234 = vld [vmem:[%s216 + $0x10] sm:$0xff]
      %v235 = vld [vmem:[%s216 + $0x18] sm:$0xff]
      %v236 = vld [vmem:[%s219] sm:$0x1]
      %v238 = vlaneseq
      %v239 = vshrl.u32 %v238, 7
      %v240 = vsub.s32 0, %v239
      %v241 = vrot.slane %v236, %v240
      %vm243 = vcmask 261120
      %v245 = vsel %vm243, %v230, 0
      %v248 = vsel %vm243, %v231, 0
      %250 = vmatprep.subr.mxu0 0.0
      %251 = vmatpush1.msra.mxu0 %v232
      %252 = vmatprep.subr.mxu0 0.0
      %253 = vmatpush1.msra.mxu0 %v233
      %254 = vmatprep.subr.mxu0 0.0
      %255 = vmatpush1.msra.mxu0 %v234
      %256 = vmatprep.subr.mxu0 0.0
      %257 = vmatpush1.msra.mxu0 %v235
      %258 = vmatprep.subr.mxu0 0.0
      %259 = vmatpush1.msra.mxu0 0.0
      %260 = vmatprep.subr.mxu0 0.0
      %261 = vmatpush1.msra.mxu0 0.0
      %262 = vmatprep.subr.mxu0 0.0
      %263 = vmatpush1.msra.mxu0 0.0
      %264 = vmatprep.subr.mxu0 0.0
      %265 = vmatpush1.msra.mxu0 0.0
      %266 = vmatprep.subr.mxu0 0.0
      %267 = vmatpush1.msra.mxu0 0.0
      %268 = vmatprep.subr.mxu0 0.0
      %269 = vmatpush1.msra.mxu0 0.0
      %270 = vmatprep.subr.mxu0 0.0
      %271 = vmatpush1.msra.mxu0 0.0
      %272 = vmatprep.subr.mxu0 0.0
      %273 = vmatpush1.msra.mxu0 0.0
      %274 = vmatprep.subr.mxu0 0.0
      %275 = vmatpush1.msra.mxu0 0.0
      %276 = vmatprep.subr.mxu0 0.0
      %277 = vmatpush1.msra.mxu0 0.0
      %278 = vmatprep.subr.mxu0 0.0
      %279 = vmatpush1.msra.mxu0 0.0
      %280 = vmatprep.subr.mxu0 0.0
      %281 = vmatpush1.msra.mxu0 0.0
      %282 = vmatprep.subr.mxu0 0.0
      %283 = vmatpush1.msra.mxu0 0.0
      %284 = vmatprep.subr.mxu0 0.0
      %285 = vmatpush1.msra.mxu0 0.0
      %286 = vmatprep.subr.mxu0 0.0
      %287 = vmatpush1.msra.mxu0 0.0
      %288 = vmatprep.subr.mxu0 0.0
      %289 = vmatpush1.msra.mxu0 0.0
      %290 = vmatprep.subr.mxu0 0.0
      %291 = vmatpush1.msra.mxu0 0.0
      %292 = vmatprep.subr.mxu0 0.0
      %293 = vmatpush1.msra.mxu0 0.0
      %294 = vmatprep.subr.mxu0 0.0
      %295 = vmatpush1.msra.mxu0 0.0
      %296 = vmatprep.subr.mxu0 0.0
      %297 = vmatpush1.msra.mxu0 0.0
      %298 = vmatprep.subr.mxu0 0.0
      %299 = vmatpush1.msra.mxu0 0.0
      %300 = vmatprep.subr.mxu0 0.0
      %301 = vmatpush1.msra.mxu0 0.0
      %302 = vmatprep.subr.mxu0 0.0
      %303 = vmatpush1.msra.mxu0 0.0
      %304 = vmatprep.subr.mxu0 0.0
      %305 = vmatpush1.msra.mxu0 0.0
      %306 = vmatprep.subr.mxu0 0.0
      %307 = vmatpush1.msra.mxu0 0.0
      %308 = vmatprep.subr.mxu0 0.0
      %309 = vmatpush1.msra.mxu0 0.0
      %310 = vmatprep.subr.mxu0 0.0
      %311 = vmatpush1.msra.mxu0 0.0
      %312 = vmatprep.subr.mxu0 0.0
      %313 = vmatpush1.msra.mxu0 0.0
      %314 = vmatprep.mubr.f32.mxu0 0.0
      %315 = vmatmul.mubr.f32.gmra.mrb[0].mxu0 %v245
      %v316 = vpop.f32.mrb[0].mxu0
      %v317 = vadd.f32 %v241, %v316
      %v318 = vpop.f32.mrb[0].mxu0
      %319 = vmatprep.mubr.f32.mxu0 0.0
      %320 = vmatmul.mubr.f32.gmra.mrb[0].mxu0 %v248
      %v321 = vpop.f32.mrb[0].mxu0
      %v322 = vadd.f32 %v241, %v321
      %v323 = vpop.f32.mrb[0].mxu0
      %324 = vdwg.mxu0
      %325 = vst.msk [vmem:[%s228] sm:$0xff] %vm243, %v317
      %326 = vst.msk [vmem:[%s228 + $0x8] sm:$0xff] %vm243, %v322
      %s327 = smul.u32 2, %s19
      %p328 = scmp.lt.s32.totalorder %s18, 2
      %s329 = scalar_select %p328, %s18, 2
      %p330 = scmp.lt.s32.totalorder %s327, 1
      %s331 = scalar_select %p330, %s327, 1
      %s332 = smul.addr %s329, 2
      %s333 = sadd.s32 %s331, %s332
      %s334 = smul.addr %s333, 8
      %s335 = scalar_lea.vmem %s3, %s334
      // Predicated region
      $region33: #{multi_head_attention.2} parent=31 // pred_check
        %p336 = pneg %p124
      $region34: #{multi_head_attention.2} parent=31 // pred_check_branch
        %338 = sbr.rel (%p336) target = $region36
      $region35: #{multi_head_attention.2} parent=31 // pred_region
        %s339 = smul.u32 2, %s19
      $region36: #{multi_head_attention.2} parent=31 // pred_fallthru
        _
    $region32: #{multi_head_attention.2} parent=5 // pred_fallthru
      _
    %p340 = scmp.le.s32.totalorder 2, %s9
    // Predicated region
    $region37: #{multi_head_attention.2} parent=5 // pred_check
      %p341 = pneg %p340
    $region38: #{multi_head_attention.2} parent=5 // pred_check_branch
      %343 = sbr.rel (%p341) target = $region40
    $region39: #{multi_head_attention.2} parent=5 // pred_region
      %s344 = ssub.s32 %s9, 2
      // Predicated region
      $region41: #{multi_head_attention.2} parent=39 // pred_check
        %p345 = pneg %p130
      $region42: #{multi_head_attention.2} parent=39 // pred_check_branch
        %347 = sbr.rel (%p345) target = $region44
      $region43: #{multi_head_attention.2} parent=39 // pred_region
        %s348 = smul.u32 2, %s21
        %p349 = scmp.lt.s32.totalorder %s20, 2
        %s350 = scalar_select %p349, %s20, 2
        %p351 = scmp.lt.s32.totalorder %s348, 1
        %s352 = scalar_select %p351, %s348, 1
        %s353 = smul.addr %s350, 2
        %s354 = sadd.s32 %s352, %s353
        %s355 = smul.addr %s354, 8
        %s356 = scalar_lea.vmem %s3, %s355
      $region44: #{multi_head_attention.2} parent=39 // pred_fallthru
        _
    $region40: #{multi_head_attention.2} parent=5 // pred_fallthru
      _
  $region6: #{multi_head_attention.2} parent=0 // loop_footer
    %s13 = sadd.s32 1, %s9
  $region7: #{multi_head_attention.2} parent=0 // loop_footer_branch
    %8 = sbr.rel target = $region3
  $region8: #{multi_head_attention.2} parent=0 // loop_exit
    _

// kernel: multi_head_attention.3
$region0: #{multi_head_attention.3}
  #allocation0 [shape = 'u32[]', space=smem, size = 0x4, offset = 0x4, fixed_abs, tag = 'smem constant byte address 0x4 - core index']
  #allocation1 [shape = 'u32[144,128]{1,0:T(1,128)}', space=vmem, size = 0x12000, scoped, tag = 'internal scratch']
  %s0 = inlined_call_operand.vmem [shape: f32[3,2,8,32], index: 0, kind: input, shape index: {}]
  %s1 = inlined_call_operand.vmem [shape: f32[32,32], index: 1, kind: input, shape index: {}]
  %s2 = inlined_call_operand.vmem [shape: f32[1,32], index: 2, kind: input, shape index: {}]
  %s3 = inlined_call_operand.hbm [shape: f32[2,8,32], index: 3, kind: output, shape index: {}]
  %s4 = sld [smem:[#allocation0]]
  $region83: #{multi_head_attention.3} parent=0
    _
  %s6 = ssub.s32 1, %s4
  %s7 = scalar_select 0, %s6, %s4
  $region1: #{multi_head_attention.3} parent=0
    #allocation2 [shape = 'u8[24576]{0}', space=vmem, size = 0x6000, scoped, tag = 'input window, operand 0']
    #allocation3 [shape = 'u8[8192]{0}', space=vmem, size = 0x2000, scoped, tag = 'output window, operand 0']
    #allocation4 [shape = 's32[2]{0}', space=sflag, size = 0x8, scoped, tag = 'scoped memory for multi_head_attention.3']
    %8 = vsyncpa [#allocation4], 0
    %s9 = scalar_lea.sflag [#allocation4], 1
    %10 = vsyncpa %s9, 0
    loop: start=0, step=1, limit=4
    $region2: #{multi_head_attention.3} parent=1 // loop_pre_header
      _
    $region3: #{multi_head_attention.3} parent=1 // loop_header
      %s12 = sphi 0, %s16
      %p13 = scmp.ge.s32.totalorder %s12, 4
      %s22 = sphi 0, %s24
      %s25 = sphi 0, %s22
      %s26 = sphi 0, %s25
      %s42 = sphi 0, %s26
      %s46 = sphi 0, %s46
      %s48 = sphi 0, %s46
      %s49 = sphi 0, %s48
      %s63 = sphi 0, %s49
      %s67 = sphi 0, %s67
      %s69 = sphi 0, %s67
      %s70 = sphi 0, %s69
      %s84 = sphi 0, %s70
      %s90 = sphi 0, %s92
      %s93 = sphi 0, %s90
      %s94 = sphi 0, %s93
      %s110 = sphi 0, %s94
    $region4: #{multi_head_attention.3} parent=1 // loop_header_branch
      %15 = sbr.rel (%p13) target = $region8
    $region5: #{multi_head_attention.3} parent=1 // loop_body
      %s17 = ssub.s32 %s12, 1
      %s18 = ssub.s32 %s12, 2
      %s19 = sadd.s32 %s12, 1
      %s20 = ssub.s32 %s12, %s19
      %p21 = scmp.eq.s32.totalorder %s20, 0
      %s23 = sadd.s32 %s22, 1
      %s24 = scalar_select %p21, %s22, %s23
      %p27 = pneg %p21
      %p28 = scmp.eq.s32.totalorder %s12, 1
      %p29 = por %p27, %p28
      %p30 = scmp.ne.s32.totalorder %s22, %s25
      %p31 = scmp.eq.s32.totalorder %s12, 0
      %p32 = por %p30, %p31
      %p33 = scmp.ne.s32.totalorder %s22, %s25
      %p34 = scmp.eq.s32.totalorder %s17, 1
      %p35 = por %p33, %p34
      %p36 = scmp.ne.s32.totalorder %s25, %s26
      %p37 = scmp.eq.s32.totalorder %s17, 0
      %p38 = por %p36, %p37
      %p39 = scmp.ne.s32.totalorder %s25, %s26
      %p40 = scmp.eq.s32.totalorder %s18, 1
      %p41 = por %p39, %p40
      %p43 = scmp.ne.s32.totalorder %s26, %s42
      %p44 = scmp.eq.s32.totalorder %s18, 0
      %p45 = por %p43, %p44
      %s47 = sadd.s32 %s46, 1
      %p50 = scmp.eq.s32.totalorder %s12, 1
      %p51 = scmp.ne.s32.totalorder %s46, %s48
      %p52 = scmp.eq.s32.totalorder %s12, 0
      %p53 = por %p51, %p52
      %p54 = scmp.ne.s32.totalorder %s46, %s48
      %p55 = scmp.eq.s32.totalorder %s17, 1
      %p56 = por %p54, %p55
      %p57 = scmp.ne.s32.totalorder %s48, %s49
      %p58 = scmp.eq.s32.totalorder %s17, 0
      %p59 = por %p57, %p58
      %p60 = scmp.ne.s32.totalorder %s48, %s49
      %p61 = scmp.eq.s32.totalorder %s18, 1
      %p62 = por %p60, %p61
      %p64 = scmp.ne.s32.totalorder %s49, %s63
      %p65 = scmp.eq.s32.totalorder %s18, 0
      %p66 = por %p64, %p65
      %s68 = sadd.s32 %s67, 1
      %p71 = scmp.eq.s32.totalorder %s12, 1
      %p72 = scmp.ne.s32.totalorder %s67, %s69
      %p73 = scmp.eq.s32.totalorder %s12, 0
      %p74 = por %p72, %p73
      %p75 = scmp.ne.s32.totalorder %s67, %s69
      %p76 = scmp.eq.s32.totalorder %s17, 1
      %p77 = por %p75, %p76
      %p78 = scmp.ne.s32.totalorder %s69, %s70
      %p79 = scmp.eq.s32.totalorder %s17, 0
      %p80 = por %p78, %p79
      %p81 = scmp.ne.s32.totalorder %s69, %s70
      %p82 = scmp.eq.s32.totalorder %s18, 1
      %p83 = por %p81, %p82
      %p85 = scmp.ne.s32.totalorder %s70, %s84
      %p86 = scmp.eq.s32.totalorder %s18, 0
      %p87 = por %p85, %p86
      %s88 = ssub.s32 %s12, %s19
      %p89 = scmp.eq.s32.totalorder %s88, 0
      %s91 = sadd.s32 %s90, 1
      %s92 = scalar_select %p89, %s90, %s91
      %p95 = pneg %p89
      %p96 = scmp.eq.s32.totalorder %s12, 1
      %p97 = por %p95, %p96
      %p98 = scmp.ne.s32.totalorder %s90, %s93
      %p99 = scmp.eq.s32.totalorder %s12, 0
      %p100 = por %p98, %p99
      %p101 = scmp.ne.s32.totalorder %s90, %s93
      %p102 = scmp.eq.s32.totalorder %s17, 1
      %p103 = por %p101, %p102
      %p104 = scmp.ne.s32.totalorder %s93, %s94
      %p105 = scmp.eq.s32.totalorder %s17, 0
      %p106 = por %p104, %p105
      %p107 = scmp.ne.s32.totalorder %s93, %s94
      %p108 = scmp.eq.s32.totalorder %s18, 1
      %p109 = por %p107, %p108
      %p111 = scmp.ne.s32.totalorder %s94, %s110
      %p112 = scmp.eq.s32.totalorder %s18, 0
      %p113 = por %p111, %p112
      %p114 = scmp.le.s32.totalorder 1, %s12
      %p115 = scmp.lt.s32.totalorder %s12, 3
      %p116 = pnand %p114, %p115
      %p117 = pneg %p116
      // Predicated region
      $region9: #{multi_head_attention.3} parent=5 // pred_check
        _
      $region10: #{multi_head_attention.3} parent=5 // pred_check_branch
        %119 = sbr.rel (%p116) target = $region12
      $region11: #{multi_head_attention.3} parent=5 // pred_region
        %s120 = ssub.s32 %s12, 1
        // Predicated region
        $region13: #{multi_head_attention.3} parent=11 // pred_check
          %p121 = pneg %p59
        $region14: #{multi_head_attention.3} parent=11 // pred_check_branch
          %123 = sbr.rel (%p121) target = $region16
        $region15: #{multi_head_attention.3} parent=11 // pred_region
          _
        $region16: #{multi_head_attention.3} parent=11 // pred_fallthru
          _
        // Predicated region
        $region17: #{multi_head_attention.3} parent=11 // pred_check
          %p124 = pneg %p80
        $region18: #{multi_head_attention.3} parent=11 // pred_check_branch
          %126 = sbr.rel (%p124) target = $region20
        $region19: #{multi_head_attention.3} parent=11 // pred_region
          _
        $region20: #{multi_head_attention.3} parent=11 // pred_fallthru
          _
      $region12: #{multi_head_attention.3} parent=5 // pred_fallthru
        _
      %p127 = scmp.lt.s32.totalorder %s12, 2
      // Predicated region
      $region21: #{multi_head_attention.3} parent=5 // pred_check
        %p128 = pneg %p127
      $region22: #{multi_head_attention.3} parent=5 // pred_check_branch
        %130 = sbr.rel (%p128) target = $region24
      $region23: #{multi_head_attention.3} parent=5 // pred_region
        // Predicated region
        $region25: #{multi_head_attention.3} parent=23 // pred_check
          %p131 = pneg %p32
        $region26: #{multi_head_attention.3} parent=23 // pred_check_branch
          %133 = sbr.rel (%p131) target = $region28
        $region27: #{multi_head_attention.3} parent=23 // pred_region
          %s134 = sand.u32 %s22, 1
          %s135 = sand.u32 %s22, 1
          %s136 = smul.addr %s135, 24
          %s137 = scalar_lea.vmem [#allocation2], %s136
          %s138 = smul.addr %s12, 8
          %s139 = scalar_lea.vmem %s0, %s138
          // Predicated region
          $region29: #{multi_head_attention.3} parent=27 // pred_check
            _
          $region30: #{multi_head_attention.3} parent=27 // pred_check_branch
            %141 = sbr.rel (0) target = $region32
          $region31: #{multi_head_attention.3} parent=27 // pred_region
            // Predicated region
            $region33: #{multi_head_attention.3} parent=31 // pred_check
              _
            $region34: #{multi_head_attention.3} parent=31 // pred_check_branch
              %143 = sbr.rel (0) target = $region36
            $region35: #{multi_head_attention.3} parent=31 // pred_region
              // Predicated region
              $region48: #{multi_head_attention.3} parent=35 // pred_check
                _
              $region49: #{multi_head_attention.3} parent=35 // pred_check_branch
                %162 = sbr.rel (0) target = $region51
              $region50: #{multi_head_attention.3} parent=35 // pred_region
                loop: start=0, step=1, limit=1
                $region52: #{multi_head_attention.3} parent=50 // loop_pre_header
                  _
                $region53: #{multi_head_attention.3} parent=50 // loop_header
                  %s164 = sphi 0, %s168
                  %p165 = scmp.ge.s32.totalorder %s164, 1
                  %s169 = sphi %s139, %s139
                  %s170 = sphi %s137, %s137
                $region54: #{multi_head_attention.3} parent=50 // loop_header_branch
                  %167 = sbr.rel (%p165) target = $region58
                $region55: #{multi_head_attention.3} parent=50 // loop_body
                  %v171 = vld [vmem:[%s169] sm:$0xff]
                  %172 = vst [vmem:[%s170] sm:$0xff] %v171
                  %v173 = vld [vmem:[%s169 + $0x10] sm:$0xff]
                  %174 = vst [vmem:[%s170 + $0x8] sm:$0xff] %v173
                  %v175 = vld [vmem:[%s169 + $0x20] sm:$0xff]
                  %176 = vst [vmem:[%s170 + $0x10] sm:$0xff] %v175
                $region56: #{multi_head_attention.3} parent=50 // loop_footer
                  %s168 = sadd.s32 1, %s164
                $region57: #{multi_head_attention.3} parent=50 // loop_footer_branch
                  %163 = sbr.rel target = $region53
                $region58: #{multi_head_attention.3} parent=50 // loop_exit
                  _
              $region51: #{multi_head_attention.3} parent=35 // pred_fallthru
                _
              // Predicated region
              $region59: #{multi_head_attention.3} parent=35 // pred_check
                _
              $region60: #{multi_head_attention.3} parent=35 // pred_check_branch
                %178 = sbr.rel target = $region62
              $region61: #{multi_head_attention.3} parent=35 // pred_region
                _
              $region62: #{multi_head_attention.3} parent=35 // pred_fallthru
                _
            $region36: #{multi_head_attention.3} parent=31 // pred_fallthru
              _
            // Predicated region
            $region37: #{multi_head_attention.3} parent=31 // pred_check
              _
            $region38: #{multi_head_attention.3} parent=31 // pred_check_branch
              %145 = sbr.rel target = $region40
            $region39: #{multi_head_attention.3} parent=31 // pred_region
              loop: start=0, step=1, limit=1
              $region41: #{multi_head_attention.3} parent=39 // loop_pre_header
                _
              $region42: #{multi_head_attention.3} parent=39 // loop_header
                %s148 = sphi 0, %s152
                %p149 = scmp.ge.s32.totalorder %s148, 1
                %s153 = sphi %s139, %s139
                %s154 = sphi %s137, %s137
              $region43: #{multi_head_attention.3} parent=39 // loop_header_branch
                %151 = sbr.rel (%p149) target = $region47
              $region44: #{multi_head_attention.3} parent=39 // loop_body
                %v155 = vld [vmem:[%s153] sm:$0xff]
                %156 = vst [vmem:[%s154] sm:$0xff] %v155
                %v157 = vld [vmem:[%s153 + $0x10] sm:$0xff]
                %158 = vst [vmem:[%s154 + $0x8] sm:$0xff] %v157
                %v159 = vld [vmem:[%s153 + $0x20] sm:$0xff]
                %160 = vst [vmem:[%s154 + $0x10] sm:$0xff] %v159
              $region45: #{multi_head_attention.3} parent=39 // loop_footer
                %s152 = sadd.s32 1, %s148
              $region46: #{multi_head_attention.3} parent=39 // loop_footer_branch
                %147 = sbr.rel target = $region42
              $region47: #{multi_head_attention.3} parent=39 // loop_exit
                _
            $region40: #{multi_head_attention.3} parent=31 // pred_fallthru
              _
          $region32: #{multi_head_attention.3} parent=27 // pred_fallthru
            _
          %179 = vnop
        $region28: #{multi_head_attention.3} parent=23 // pred_fallthru
          _
      $region24: #{multi_head_attention.3} parent=5 // pred_fallthru
        _
      %p180 = scmp.le.s32.totalorder 1, %s12
      %p181 = scmp.lt.s32.totalorder %s12, 3
      %p182 = pnand %p180, %p181
      %p183 = pneg %p182
      // Predicated region
      $region63: #{multi_head_attention.3} parent=5 // pred_check
        _
      $region64: #{multi_head_attention.3} parent=5 // pred_check_branch
        %185 = sbr.rel (%p182) target = $region66
      $region65: #{multi_head_attention.3} parent=5 // pred_region
        %s186 = ssub.s32 %s12, 1
        %s187 = sand.u32 %s25, 1
        %s188 = sand.u32 %s25, 1
        %s189 = smul.addr %s188, 24
        %s190 = scalar_lea.vmem [#allocation2], %s189
        // Predicated region
        $region67: #{multi_head_attention.3} parent=65 // pred_check
          %p191 = pneg %p38
        $region68: #{multi_head_attention.3} parent=65 // pred_check_branch
          %193 = sbr.rel (%p191) target = $region70
        $region69: #{multi_head_attention.3} parent=65 // pred_region
          _
        $region70: #{multi_head_attention.3} parent=65 // pred_fallthru
          _
        %s194 = sand.u32 %s25, 1
        %s195 = sand.u32 %s25, 1
        %s196 = smul.addr %s195, 24
        %s197 = scalar_lea.vmem [#allocation2], %s196
        %p198 = pneg %p38
        %p199 = pneg %p35
        %p200 = pneg %p59
        %p201 = pneg %p56
        %p202 = pneg %p80
        %p203 = pneg %p77
        %p204 = pneg %p106
        %p205 = pneg %p103
        %s206 = sand.u32 %s93, 1
        %s207 = scalar_lea.sflag [#allocation4], %s206
        %s208 = sand.u32 %s93, 1
        %s209 = smul.addr %s208, 8
        %s210 = scalar_lea.vmem [#allocation3], %s209
        %v211 = vld [vmem:[%s190] sm:$0xff]
        %s212 = scalar_lea.vmem %s190, 8 [#allocation2]
        %v213 = vld [vmem:[%s212] sm:$0xff]
        %s214 = scalar_lea.vmem %s190, 16 [#allocation2]
        %v215 = vld [vmem:[%s214] sm:$0xff]
        %vm216 = vcmask 64512
        %v218 = vsel %vm216, %v211, 0
        %v221 = vsel %vm216, %v213, 0
        %223 = vmatprep.subr.mxu0 0.0
        %224 = vmatpush1.xpose.msra.mxu0 %v221
        %225 = vmatprep.subr.mxu0 0.0
        %226 = vmatpush1.xpose.msra.mxu0 0.0
        %227 = vmatprep.subr.mxu0 0.0
        %228 = vmatpush1.xpose.msra.mxu0 0.0
        %229 = vmatprep.subr.mxu0 0.0
        %230 = vmatpush1.xpose.msra.mxu0 0.0
        %231 = vmatprep.subr.mxu0 0.0
        %232 = vmatpush1.xpose.msra.mxu0 0.0
        %233 = vmatprep.subr.mxu0 0.0
        %234 = vmatpush1.xpose.msra.mxu0 0.0
        %235 = vmatprep.subr.mxu0 0.0
        %236 = vmatpush1.xpose.msra.mxu0 0.0
        %237 = vmatprep.subr.mxu0 0.0
        %238 = vmatpush1.xpose.msra.mxu0 0.0
        %239 = vmatprep.subr.mxu0 0.0
        %240 = vmatpush1.xpose.msra.mxu0 0.0
        %241 = vmatprep.subr.mxu0 0.0
        %242 = vmatpush1.xpose.msra.mxu0 0.0
        %243 = vmatprep.subr.mxu0 0.0
        %244 = vmatpush1.xpose.msra.mxu0 0.0
        %245 = vmatprep.subr.mxu0 0.0
        %246 = vmatpush1.xpose.msra.mxu0 0.0
        %247 = vmatprep.subr.mxu0 0.0
        %248 = vmatpush1.xpose.msra.mxu0 0.0
        %249 = vmatprep.subr.mxu0 0.0
        %250 = vmatpush1.xpose.msra.mxu0 0.0
        %251 = vmatprep.subr.mxu0 0.0
        %252 = vmatpush1.xpose.msra.mxu0 0.0
        %253 = vmatprep.subr.mxu0 0.0
        %254 = vmatpush1.xpose.msra.mxu0 0.0
        %255 = vmatprep.subr.mxu0 0.0
        %256 = vmatpush1.xpose.msra.mxu0 0.0
        %257 = vmatprep.subr.mxu0 0.0
        %258 = vmatpush1.xpose.msra.mxu0 0.0
        %259 = vmatprep.subr.mxu0 0.0
        %260 = vmatpush1.xpose.msra.mxu0 0.0
        %261 = vmatprep.subr.mxu0 0.0
        %262 = vmatpush1.xpose.msra.mxu0 0.0
        %263 = vmatprep.subr.mxu0 0.0
        %264 = vmatpush1.xpose.msra.mxu0 0.0
        %265 = vmatprep.subr.mxu0 0.0
        %266 = vmatpush1.xpose.msra.mxu0 0.0
        %267 = vmatprep.subr.mxu0 0.0
        %268 = vmatpush1.xpose.msra.mxu0 0.0
        %269 = vmatprep.subr.mxu0 0.0
        %270 = vmatpush1.xpose.msra.mxu0 0.0
        %271 = vmatprep.subr.mxu0 0.0
        %272 = vmatpush1.xpose.msra.mxu0 0.0
        %273 = vmatprep.subr.mxu0 0.0
        %274 = vmatpush1.xpose.msra.mxu0 0.0
        %275 = vmatprep.subr.mxu0 0.0
        %276 = vmatpush1.xpose.msra.mxu0 0.0
        %277 = vmatprep.subr.mxu0 0.0
        %278 = vmatpush1.xpose.msra.mxu0 0.0
        %279 = vmatprep.subr.mxu0 0.0
        %280 = vmatpush1.xpose.msra.mxu0 0.0
        %281 = vmatprep.subr.mxu0 0.0
        %282 = vmatpush1.xpose.msra.mxu0 0.0
        %283 = vmatprep.subr.mxu0 0.0
        %284 = vmatpush1.xpose.msra.mxu0 0.0
        %285 = vmatprep.subr.mxu0 0.0
        %286 = vmatpush1.xpose.msra.mxu0 0.0
        %287 = vmatprep.mubr.f32.mxu0 0.0
        %288 = vmatmul.mubr.f32.gmra.mrb[0].mxu0 %v218
        %v289 = vpop.f32.mrb[0].mxu0
        %v290 = vadd.f32 0.0, %v289
        %v291 = vpop.f32.mrb[0].mxu0
        %292 = vdwg.mxu0
        %v293 = vsel %vm216, %v290, -inf
        %294 = vmax.xlane.f32.xlu0 %v293
        %v295 = vpop.xlane.xlu0 %294
        %v296 = vsub.f32 %v290, %v295
        %v297 = vmul.f32 %v296, 1.442695
        %v298 = vpow.pop %v297
        %v299 = vsel %vm216, %v298, 0.0
        %300 = vadd.xlane.f32.xlu0 %v299
        %v301 = vpop.xlane.xlu0 %300
        %v302 = vrcp.pop %v301
        %v303 = vmul.f32 %v298, %v302
        %v305 = vsel %vm216, %v303, 0
        %307 = vmatprep.subr.mxu0 0.0
        %308 = vmatpush1.msra.mxu0 %v215
        %309 = vmatprep.subr.mxu0 0.0
        %310 = vmatpush1.msra.mxu0 0.0
        %311 = vmatprep.subr.mxu0 0.0
        %312 = vmatpush1.msra.mxu0 0.0
        %313 = vmatprep.subr.mxu0 0.0
        %314 = vmatpush1.msra.mxu0 0.0
        %315 = vmatprep.subr.mxu0 0.0
        %316 = vmatpush1.msra.mxu0 0.0
        %317 = vmatprep.subr.mxu0 0.0
        %318 = vmatpush1.msra.mxu0 0.0
        %319 = vmatprep.subr.mxu0 0.0
        %320 = vmatpush1.msra.mxu0 0.0
        %321 = vmatprep.subr.mxu0 0.0
        %322 = vmatpush1.msra.mxu0 0.0
        %323 = vmatprep.subr.mxu0 0.0
        %324 = vmatpush1.msra.mxu0 0.0
        %325 = vmatprep.subr.mxu0 0.0
        %326 = vmatpush1.msra.mxu0 0.0
        %327 = vmatprep.subr.mxu0 0.0
        %328 = vmatpush1.msra.mxu0 0.0
        %329 = vmatprep.subr.mxu0 0.0
        %330 = vmatpush1.msra.mxu0 0.0
        %331 = vmatprep.subr.mxu0 0.0
        %332 = vmatpush1.msra.mxu0 0.0
        %333 = vmatprep.subr.mxu0 0.0
        %334 = vmatpush1.msra.mxu0 0.0
        %335 = vmatprep.subr.mxu0 0.0
        %336 = vmatpush1.msra.mxu0 0.0
        %337 = vmatprep.subr.mxu0 0.0
        %338 = vmatpush1.msra.mxu0 0.0
        %339 = vmatprep.subr.mxu0 0.0
        %340 = vmatpush1.msra.mxu0 0.0
        %341 = vmatprep.subr.mxu0 0.0
        %342 = vmatpush1.msra.mxu0 0.0
        %343 = vmatprep.subr.mxu0 0.0
        %344 = vmatpush1.msra.mxu0 0.0
        %345 = vmatprep.subr.mxu0 0.0
        %346 = vmatpush1.msra.mxu0 0.0
        %347 = vmatprep.subr.mxu0 0.0
        %348 = vmatpush1.msra.mxu0 0.0
        %349 = vmatprep.subr.mxu0 0.0
        %350 = vmatpush1.msra.mxu0 0.0
        %351 = vmatprep.subr.mxu0 0.0
        %352 = vmatpush1.msra.mxu0 0.0
        %353 = vmatprep.subr.mxu0 0.0
        %354 = vmatpush1.msra.mxu0 0.0
        %355 = vmatprep.subr.mxu0 0.0
        %356 = vmatpush1.msra.mxu0 0.0
        %357 = vmatprep.subr.mxu0 0.0
        %358 = vmatpush1.msra.mxu0 0.0
        %359 = vmatprep.subr.mxu0 0.0
        %360 = vmatpush1.msra.mxu0 0.0
        %361 = vmatprep.subr.mxu0 0.0
        %362 = vmatpush1.msra.mxu0 0.0
        %363 = vmatprep.subr.mxu0 0.0
        %364 = vmatpush1.msra.mxu0 0.0
        %365 = vmatprep.subr.mxu0 0.0
        %366 = vmatpush1.msra.mxu0 0.0
        %367 = vmatprep.subr.mxu0 0.0
        %368 = vmatpush1.msra.mxu0 0.0
        %369 = vmatprep.subr.mxu0 0.0
        %370 = vmatpush1.msra.mxu0 0.0
        %371 = vmatprep.mubr.f32.mxu0 0.0
        %372 = vmatmul.mubr.f32.gmra.mrb[0].mxu0 %v305
        %v373 = vpop.f32.mrb[0].mxu0
        %v374 = vadd.f32 0.0, %v373
        %v375 = vpop.f32.mrb[0].mxu0
        %376 = vdwg.mxu0
        %v377 = vld [vmem:[%s1] sm:$0xff]
        %378 = vrot.lane.b32.xlu0 %v211, 120
        %v379 = vpop.permute.xlu0 %378
        %380 = vrot.lane.b32.xlu0 %v213, 120
        %v381 = vpop.permute.xlu0 %380
        %v382 = vsel %vm216, %v379, 0
        %v384 = vsel %vm216, %v381, 0
        %386 = vmatprep.subr.mxu0 0.0
        %387 = vmatpush1.xpose.msra.mxu0 %v384
        %388 = vmatprep.subr.mxu0 0.0
        %389 = vmatpush1.xpose.msra.mxu0 0.0
        %390 = vmatprep.subr.mxu0 0.0
        %391 = vmatpush1.xpose.msra.mxu0 0.0
        %392 = vmatprep.subr.mxu0 0.0
        %393 = vmatpush1.xpose.msra.mxu0 0.0
        %394 = vmatprep.subr.mxu0 0.0
        %395 = vmatpush1.xpose.msra.mxu0 0.0
        %396 = vmatprep.subr.mxu0 0.0
        %397 = vmatpush1.xpose.msra.mxu0 0.0
        %398 = vmatprep.subr.mxu0 0.0
        %399 = vmatpush1.xpose.msra.mxu0 0.0
        %400 = vmatprep.subr.mxu0 0.0
        %401 = vmatpush1.xpose.msra.mxu0 0.0
        %402 = vmatprep.subr.mxu0 0.0
        %403 = vmatpush1.xpose.msra.mxu0 0.0
        %404 = vmatprep.subr.mxu0 0.0
        %405 = vmatpush1.xpose.msra.mxu0 0.0
        %406 = vmatprep.subr.mxu0 0.0
        %407 = vmatpush1.xpose.msra.mxu0 0.0
        %408 = vmatprep.subr.mxu0 0.0
        %409 = vmatpush1.xpose.msra.mxu0 0.0
        %410 = vmatprep.subr.mxu0 0.0
        %411 = vmatpush1.xpose.msra.mxu0 0.0
        %412 = vmatprep.subr.mxu0 0.0
        %413 = vmatpush1.xpose.msra.mxu0 0.0
        %414 = vmatprep.subr.mxu0 0.0
        %415 = vmatpush1.xpose.msra.mxu0 0.0
        %416 = vmatprep.subr.mxu0 0.0
        %417 = vmatpush1.xpose.msra.mxu0 0.0
        %418 = vmatprep.subr.mxu0 0.0
        %419 = vmatpush1.xpose.msra.mxu0 0.0
        %420 = vmatprep.subr.mxu0 0.0
        %421 = vmatpush1.xpose.msra.mxu0 0.0
        %422 = vmatprep.subr.mxu0 0.0
        %423 = vmatpush1.xpose.msra.mxu0 0.0
        %424 = vmatprep.subr.mxu0 0.0
        %425 = vmatpush1.xpose.msra.mxu0 0.0
        %426 = vmatprep.subr.mxu0 0.0
        %427 = vmatpush1.xpose.msra.mxu0 0.0
        %428 = vmatprep.subr.mxu0 0.0
        %429 = vmatpush1.xpose.msra.mxu0 0.0
        %430 = vmatprep.subr.mxu0 0.0
        %431 = vmatpush1.xpose.msra.mxu0 0.0
        %432 = vmatprep.subr.mxu0 0.0
        %433 = vmatpush1.xpose.msra.mxu0 0.0
        %434 = vmatprep.subr.mxu0 0.0
        %435 = vmatpush1.xpose.msra.mxu0 0.0
        %436 = vmatprep.subr.mxu0 0.0
        %437 = vmatpush1.xpose.msra.mxu0 0.0
        %438 = vmatprep.subr.mxu0 0.0
        %439 = vmatpush1.xpose.msra.mxu0 0.0
        %440 = vmatprep.subr.mxu0 0.0
        %441 = vmatpush1.xpose.msra.mxu0 0.0
        %442 = vmatprep.subr.mxu0 0.0
        %443 = vmatpush1.xpose.msra.mxu0 0.0
        %444 = vmatprep.subr.mxu0 0.0
        %445 = vmatpush1.xpose.msra.mxu0 0.0
        %446 = vmatprep.subr.mxu0 0.0
        %447 = vmatpush1.xpose.msra.mxu0 0.0
        %448 = vmatprep.subr.mxu0 0.0
        %449 = vmatpush1.xpose.msra.mxu0 0.0
        %450 = vmatprep.mubr.f32.mxu0 0.0
        %451 = vmatmul.mubr.f32.gmra.mrb[0].mxu0 %v382
        %v452 = vpop.f32.mrb[0].mxu0
        %v453 = vadd.f32 0.0, %v452
        %v454 = vpop.f32.mrb[0].mxu0
        %455 = vdwg.mxu0
        %v456 = vsel %vm216, %v453, -inf
        %457 = vmax.xlane.f32.xlu0 %v456
        %v458 = vpop.xlane.xlu0 %457
        %v459 = vsub.f32 %v453, %v458
        %v460 = vmul.f32 %v459, 1.442695
        %v461 = vpow.pop %v460
        %v462 = vsel %vm216, %v461, 0.0
        %463 = vadd.xlane.f32.xlu0 %v462
        %v464 = vpop.xlane.xlu0 %463
        %v465 = vrcp.pop %v464
        %v466 = vmul.f32 %v461, %v465
        %468 = vrot.lane.b32.xlu0 %v215, 120
        %v469 = vpop.permute.xlu0 %468
        %v472 = vsel %vm216, %v466, 0
        %474 = vmatprep.subr.mxu0 0.0
        %475 = vmatpush1.msra.mxu0 %v469
        %476 = vmatprep.subr.mxu0 0.0
        %477 = vmatpush1.msra.mxu0 0.0
        %478 = vmatprep.subr.mxu0 0.0
        %479 = vmatpush1.msra.mxu0 0.0
        %480 = vmatprep.subr.mxu0 0.0
        %481 = vmatpush1.msra.mxu0 0.0
        %482 = vmatprep.subr.mxu0 0.0
        %483 = vmatpush1.msra.mxu0 0.0
        %484 = vmatprep.subr.mxu0 0.0
        %485 = vmatpush1.msra.mxu0 0.0
        %486 = vmatprep.subr.mxu0 0.0
        %487 = vmatpush1.msra.mxu0 0.0
        %488 = vmatprep.subr.mxu0 0.0
        %489 = vmatpush1.msra.mxu0 0.0
        %490 = vmatprep.subr.mxu0 0.0
        %491 = vmatpush1.msra.mxu0 0.0
        %492 = vmatprep.subr.mxu0 0.0
        %493 = vmatpush1.msra.mxu0 0.0
        %494 = vmatprep.subr.mxu0 0.0
        %495 = vmatpush1.msra.mxu0 0.0
        %496 = vmatprep.subr.mxu0 0.0
        %497 = vmatpush1.msra.mxu0 0.0
        %498 = vmatprep.subr.mxu0 0.0
        %499 = vmatpush1.msra.mxu0 0.0
        %500 = vmatprep.subr.mxu0 0.0
        %501 = vmatpush1.msra.mxu0 0.0
        %502 = vmatprep.subr.mxu0 0.0
        %503 = vmatpush1.msra.mxu0 0.0
        %504 = vmatprep.subr.mxu0 0.0
        %505 = vmatpush1.msra.mxu0 0.0
        %506 = vmatprep.subr.mxu0 0.0
        %507 = vmatpush1.msra.mxu0 0.0
        %508 = vmatprep.subr.mxu0 0.0
        %509 = vmatpush1.msra.mxu0 0.0
        %510 = vmatprep.subr.mxu0 0.0
        %511 = vmatpush1.msra.mxu0 0.0
        %512 = vmatprep.subr.mxu0 0.0
        %513 = vmatpush1.msra.mxu0 0.0
        %514 = vmatprep.subr.mxu0 0.0
        %515 = vmatpush1.msra.mxu0 0.0
        %516 = vmatprep.subr.mxu0 0.0
        %517 = vmatpush1.msra.mxu0 0.0
        %518 = vmatprep.subr.mxu0 0.0
        %519 = vmatpush1.msra.mxu0 0.0
        %520 = vmatprep.subr.mxu0 0.0
        %521 = vmatpush1.msra.mxu0 0.0
        %522 = vmatprep.subr.mxu0 0.0
        %523 = vmatpush1.msra.mxu0 0.0
        %524 = vmatprep.subr.mxu0 0.0
        %525 = vmatpush1.msra.mxu0 0.0
        %526 = vmatprep.subr.mxu0 0.0
        %527 = vmatpush1.msra.mxu0 0.0
        %528 = vmatprep.subr.mxu0 0.0
        %529 = vmatpush1.msra.mxu0 0.0
        %530 = vmatprep.subr.mxu0 0.0
        %531 = vmatpush1.msra.mxu0 0.0
        %532 = vmatprep.subr.mxu0 0.0
        %533 = vmatpush1.msra.mxu0 0.0
        %534 = vmatprep.subr.mxu0 0.0
        %535 = vmatpush1.msra.mxu0 0.0
        %536 = vmatprep.subr.mxu0 0.0
        %537 = vmatpush1.msra.mxu0 0.0
        %538 = vmatprep.mubr.f32.mxu0 0.0
        %539 = vmatmul.mubr.f32.gmra.mrb[0].mxu0 %v472
        %v540 = vpop.f32.mrb[0].mxu0
        %v541 = vadd.f32 0.0, %v540
        %v542 = vpop.f32.mrb[0].mxu0
        %543 = vdwg.mxu0
        %v544 = vld [vmem:[%s1 + $0x8] sm:$0xff]
        %v546 = vsel %vm216, %v541, 0
        %548 = vmatprep.subr.mxu0 0.0
        %549 = vmatpush1.msra.mxu0 %v544
        %550 = vmatprep.subr.mxu0 0.0
        %551 = vmatpush1.msra.mxu0 0.0
        %552 = vmatprep.subr.mxu0 0.0
        %553 = vmatpush1.msra.mxu0 0.0
        %554 = vmatprep.subr.mxu0 0.0
        %555 = vmatpush1.msra.mxu0 0.0
        %556 = vmatprep.subr.mxu0 0.0
        %557 = vmatpush1.msra.mxu0 0.0
        %558 = vmatprep.subr.mxu0 0.0
        %559 = vmatpush1.msra.mxu0 0.0
        %560 = vmatprep.subr.mxu0 0.0
        %561 = vmatpush1.msra.mxu0 0.0
        %562 = vmatprep.subr.mxu0 0.0
        %563 = vmatpush1.msra.mxu0 0.0
        %564 = vmatprep.subr.mxu0 0.0
        %565 = vmatpush1.msra.mxu0 0.0
        %566 = vmatprep.subr.mxu0 0.0
        %567 = vmatpush1.msra.mxu0 0.0
        %568 = vmatprep.subr.mxu0 0.0
        %569 = vmatpush1.msra.mxu0 0.0
        %570 = vmatprep.subr.mxu0 0.0
        %571 = vmatpush1.msra.mxu0 0.0
        %572 = vmatprep.subr.mxu0 0.0
        %573 = vmatpush1.msra.mxu0 0.0
        %574 = vmatprep.subr.mxu0 0.0
        %575 = vmatpush1.msra.mxu0 0.0
        %576 = vmatprep.subr.mxu0 0.0
        %577 = vmatpush1.msra.mxu0 0.0
        %578 = vmatprep.subr.mxu0 0.0
        %579 = vmatpush1.msra.mxu0 0.0
        %580 = vmatprep.subr.mxu0 0.0
        %581 = vmatpush1.msra.mxu0 0.0
        %582 = vmatprep.subr.mxu0 0.0
        %583 = vmatpush1.msra.mxu0 0.0
        %584 = vmatprep.subr.mxu0 0.0
        %585 = vmatpush1.msra.mxu0 0.0
        %586 = vmatprep.subr.mxu0 0.0
        %587 = vmatpush1.msra.mxu0 0.0
        %588 = vmatprep.subr.mxu0 0.0
        %589 = vmatpush1.msra.mxu0 0.0
        %590 = vmatprep.subr.mxu0 0.0
        %591 = vmatpush1.msra.mxu0 0.0
        %592 = vmatprep.subr.mxu0 0.0
        %593 = vmatpush1.msra.mxu0 0.0
        %594 = vmatprep.subr.mxu0 0.0
        %595 = vmatpush1.msra.mxu0 0.0
        %596 = vmatprep.subr.mxu0 0.0
        %597 = vmatpush1.msra.mxu0 0.0
        %598 = vmatprep.subr.mxu0 0.0
        %599 = vmatpush1.msra.mxu0 0.0
        %600 = vmatprep.subr.mxu0 0.0
        %601 = vmatpush1.msra.mxu0 0.0
        %602 = vmatprep.subr.mxu0 0.0
        %603 = vmatpush1.msra.mxu0 0.0
        %604 = vmatprep.subr.mxu0 0.0
        %605 = vmatpush1.msra.mxu0 0.0
        %606 = vmatprep.subr.mxu0 0.0
        %607 = vmatpush1.msra.mxu0 0.0
        %608 = vmatprep.subr.mxu0 0.0
        %609 = vmatpush1.msra.mxu0 0.0
        %610 = vmatprep.subr.mxu0 0.0
        %611 = vmatpush1.msra.mxu0 0.0
        %612 = vmatprep.mubr.f32.mxu0 0.0
        %613 = vmatmul.mubr.f32.gmra.mrb[0].mxu0 %v546
        %v614 = vpop.f32.mrb[0].mxu0
        %v615 = vadd.f32 0.0, %v614
        %v616 = vpop.f32.mrb[0].mxu0
        %617 = vdwg.mxu0
        %v619 = vsel %vm216, %v374, 0
        %621 = vmatprep.subr.mxu0 0.0
        %622 = vmatpush1.msra.mxu0 %v377
        %623 = vmatprep.subr.mxu0 0.0
        %624 = vmatpush1.msra.mxu0 0.0
        %625 = vmatprep.subr.mxu0 0.0
        %626 = vmatpush1.msra.mxu0 0.0
        %627 = vmatprep.subr.mxu0 0.0
        %628 = vmatpush1.msra.mxu0 0.0
        %629 = vmatprep.subr.mxu0 0.0
        %630 = vmatpush1.msra.mxu0 0.0
        %631 = vmatprep.subr.mxu0 0.0
        %632 = vmatpush1.msra.mxu0 0.0
        %633 = vmatprep.subr.mxu0 0.0
        %634 = vmatpush1.msra.mxu0 0.0
        %635 = vmatprep.subr.mxu0 0.0
        %636 = vmatpush1.msra.mxu0 0.0
        %637 = vmatprep.subr.mxu0 0.0
        %638 = vmatpush1.msra.mxu0 0.0
        %639 = vmatprep.subr.mxu0 0.0
        %640 = vmatpush1.msra.mxu0 0.0
        %641 = vmatprep.subr.mxu0 0.0
        %642 = vmatpush1.msra.mxu0 0.0
        %643 = vmatprep.subr.mxu0 0.0
        %644 = vmatpush1.msra.mxu0 0.0
        %645 = vmatprep.subr.mxu0 0.0
        %646 = vmatpush1.msra.mxu0 0.0
        %647 = vmatprep.subr.mxu0 0.0
        %648 = vmatpush1.msra.mxu0 0.0
        %649 = vmatprep.subr.mxu0 0.0
        %650 = vmatpush1.msra.mxu0 0.0
        %651 = vmatprep.subr.mxu0 0.0
        %652 = vmatpush1.msra.mxu0 0.0
        %653 = vmatprep.subr.mxu0 0.0
        %654 = vmatpush1.msra.mxu0 0.0
        %655 = vmatprep.subr.mxu0 0.0
        %656 = vmatpush1.msra.mxu0 0.0
        %657 = vmatprep.subr.mxu0 0.0
        %658 = vmatpush1.msra.mxu0 0.0
        %659 = vmatprep.subr.mxu0 0.0
        %660 = vmatpush1.msra.mxu0 0.0
        %661 = vmatprep.subr.mxu0 0.0
        %662 = vmatpush1.msra.mxu0 0.0
        %663 = vmatprep.subr.mxu0 0.0
        %664 = vmatpush1.msra.mxu0 0.0
        %665 = vmatprep.subr.mxu0 0.0
        %666 = vmatpush1.msra.mxu0 0.0
        %667 = vmatprep.subr.mxu0 0.0
        %668 = vmatpush1.msra.mxu0 0.0
        %669 = vmatprep.subr.mxu0 0.0
        %670 = vmatpush1.msra.mxu0 0.0
        %671 = vmatprep.subr.mxu0 0.0
        %672 = vmatpush1.msra.mxu0 0.0
        %673 = vmatprep.subr.mxu0 0.0
        %674 = vmatpush1.msra.mxu0 0.0
        %675 = vmatprep.subr.mxu0 0.0
        %676 = vmatpush1.msra.mxu0 0.0
        %677 = vmatprep.subr.mxu0 0.0
        %678 = vmatpush1.msra.mxu0 0.0
        %679 = vmatprep.subr.mxu0 0.0
        %680 = vmatpush1.msra.mxu0 0.0
        %681 = vmatprep.subr.mxu0 0.0
        %682 = vmatpush1.msra.mxu0 0.0
        %683 = vmatprep.subr.mxu0 0.0
        %684 = vmatpush1.msra.mxu0 0.0
        %685 = vmatprep.mubr.f32.mxu0 0.0
        %686 = vmatmul.mubr.f32.gmra.mrb[0].mxu0 %v619
        %v687 = vpop.f32.mrb[0].mxu0
        %v688 = vadd.f32 %v615, %v687
        %v689 = vpop.f32.mrb[0].mxu0
        %690 = vdwg.mxu0
        %691 = vrot.lane.b32.xlu0 %v211, 112
        %v692 = vpop.permute.xlu0 %691
        %693 = vrot.lane.b32.xlu0 %v213, 112
        %v694 = vpop.permute.xlu0 %693
        %v695 = vsel %vm216, %v692, 0
        %v697 = vsel %vm216, %v694, 0
        %699 = vmatprep.subr.mxu0 0.0
        %700 = vmatpush1.xpose.msra.mxu0 %v697
        %701 = vmatprep.subr.mxu0 0.0
        %702 = vmatpush1.xpose.msra.mxu0 0.0
        %703 = vmatprep.subr.mxu0 0.0
        %704 = vmatpush1.xpose.msra.mxu0 0.0
        %705 = vmatprep.subr.mxu0 0.0
        %706 = vmatpush1.xpose.msra.mxu0 0.0
        %707 = vmatprep.subr.mxu0 0.0
        %708 = vmatpush1.xpose.msra.mxu0 0.0
        %709 = vmatprep.subr.mxu0 0.0
        %710 = vmatpush1.xpose.msra.mxu0 0.0
        %711 = vmatprep.subr.mxu0 0.0
        %712 = vmatpush1.xpose.msra.mxu0 0.0
        %713 = vmatprep.subr.mxu0 0.0
        %714 = vmatpush1.xpose.msra.mxu0 0.0
        %715 = vmatprep.subr.mxu0 0.0
        %716 = vmatpush1.xpose.msra.mxu0 0.0
        %717 = vmatprep.subr.mxu0 0.0
        %718 = vmatpush1.xpose.msra.mxu0 0.0
        %719 = vmatprep.subr.mxu0 0.0
        %720 = vmatpush1.xpose.msra.mxu0 0.0
        %721 = vmatprep.subr.mxu0 0.0
        %722 = vmatpush1.xpose.msra.mxu0 0.0
        %723 = vmatprep.subr.mxu0 0.0
        %724 = vmatpush1.xpose.msra.mxu0 0.0
        %725 = vmatprep.subr.mxu0 0.0
        %726 = vmatpush1.xpose.msra.mxu0 0.0
        %727 = vmatprep.subr.mxu0 0.0
        %728 = vmatpush1.xpose.msra.mxu0 0.0
        %729 = vmatprep.subr.mxu0 0.0
        %730 = vmatpush1.xpose.msra.mxu0 0.0
        %731 = vmatprep.subr.mxu0 0.0
        %732 = vmatpush1.xpose.msra.mxu0 0.0
        %733 = vmatprep.subr.mxu0 0.0
        %734 = vmatpush1.xpose.msra.mxu0 0.0
        %735 = vmatprep.subr.mxu0 0.0
        %736 = vmatpush1.xpose.msra.mxu0 0.0
        %737 = vmatprep.subr.mxu0 0.0
        %738 = vmatpush1.xpose.msra.mxu0 0.0
        %739 = vmatprep.subr.mxu0 0.0
        %740 = vmatpush1.xpose.msra.mxu0 0.0
        %741 = vmatprep.subr.mxu0 0.0
        %742 = vmatpush1.xpose.msra.mxu0 0.0
        %743 = vmatprep.subr.mxu0 0.0
        %744 = vmatpush1.xpose.msra.mxu0 0.0
        %745 = vmatprep.subr.mxu0 0.0
        %746 = vmatpush1.xpose.msra.mxu0 0.0
        %747 = vmatprep.subr.mxu0 0.0
        %748 = vmatpush1.xpose.msra.mxu0 0.0
        %749 = vmatprep.subr.mxu0 0.0
        %750 = vmatpush1.xpose.msra.mxu0 0.0
        %751 = vmatprep.subr.mxu0 0.0
        %752 = vmatpush1.xpose.msra.mxu0 0.0
        %753 = vmatprep.subr.mxu0 0.0
        %754 = vmatpush1.xpose.msra.mxu0 0.0
        %755 = vmatprep.subr.mxu0 0.0
        %756 = vmatpush1.xpose.msra.mxu0 0.0
        %757 = vmatprep.subr.mxu0 0.0
        %758 = vmatpush1.xpose.msra.mxu0 0.0
        %759 = vmatprep.subr.mxu0 0.0
        %760 = vmatpush1.xpose.msra.mxu0 0.0
        %761 = vmatprep.subr.mxu0 0.0
        %762 = vmatpush1.xpose.msra.mxu0 0.0
        %763 = vmatprep.mubr.f32.mxu0 0.0
        %764 = vmatmul.mubr.f32.gmra.mrb[0].mxu0 %v695
        %v765 = vpop.f32.mrb[0].mxu0
        %v766 = vadd.f32 0.0, %v765
        %v767 = vpop.f32.mrb[0].mxu0
        %768 = vdwg.mxu0
        %v769 = vsel %vm216, %v766, -inf
        %770 = vmax.xlane.f32.xlu0 %v769
        %v771 = vpop.xlane.xlu0 %770
        %v772 = vsub.f32 %v766, %v771
        %v773 = vmul.f32 %v772, 1.442695
        %v774 = vpow.pop %v773
        %v775 = vsel %vm216, %v774, 0.0
        %776 = vadd.xlane.f32.xlu0 %v775
        %v777 = vpop.xlane.xlu0 %776
        %v778 = vrcp.pop %v777
        %v779 = vmul.f32 %v774, %v778
        %780 = vrot.lane.b32.xlu0 %v215, 112
        %v781 = vpop.permute.xlu0 %780
        %v784 = vsel %vm216, %v779, 0
        %786 = vmatprep.subr.mxu0 0.0
        %787 = vmatpush1.msra.mxu0 %v781
        %788 = vmatprep.subr.mxu0 0.0
        %789 = vmatpush1.msra.mxu0 0.0
        %790 = vmatprep.subr.mxu0 0.0
        %791 = vmatpush1.msra.mxu0 0.0
        %792 = vmatprep.subr.mxu0 0.0
        %793 = vmatpush1.msra.mxu0 0.0
        %794 = vmatprep.subr.mxu0 0.0
        %795 = vmatpush1.msra.mxu0 0.0
        %796 = vmatprep.subr.mxu0 0.0
        %797 = vmatpush1.msra.mxu0 0.0
        %798 = vmatprep.subr.mxu0 0.0
        %799 = vmatpush1.msra.mxu0 0.0
        %800 = vmatprep.subr.mxu0 0.0
        %801 = vmatpush1.msra.mxu0 0.0
        %802 = vmatprep.subr.mxu0 0.0
        %803 = vmatpush1.msra.mxu0 0.0
        %804 = vmatprep.subr.mxu0 0.0
        %805 = vmatpush1.msra.mxu0 0.0
        %806 = vmatprep.subr.mxu0 0.0
        %807 = vmatpush1.msra.mxu0 0.0
        %808 = vmatprep.subr.mxu0 0.0
        %809 = vmatpush1.msra.mxu0 0.0
        %810 = vmatprep.subr.mxu0 0.0
        %811 = vmatpush1.msra.mxu0 0.0
        %812 = vmatprep.subr.mxu0 0.0
        %813 = vmatpush1.msra.mxu0 0.0
        %814 = vmatprep.subr.mxu0 0.0
        %815 = vmatpush1.msra.mxu0 0.0
        %816 = vmatprep.subr.mxu0 0.0
        %817 = vmatpush1.msra.mxu0 0.0
        %818 = vmatprep.subr.mxu0 0.0
        %819 = vmatpush1.msra.mxu0 0.0
        %820 = vmatprep.subr.mxu0 0.0
        %821 = vmatpush1.msra.mxu0 0.0
        %822 = vmatprep.subr.mxu0 0.0
        %823 = vmatpush1.msra.mxu0 0.0
        %824 = vmatprep.subr.mxu0 0.0
        %825 = vmatpush1.msra.mxu0 0.0
        %826 = vmatprep.subr.mxu0 0.0
        %827 = vmatpush1.msra.mxu0 0.0
        %828 = vmatprep.subr.mxu0 0.0
        %829 = vmatpush1.msra.mxu0 0.0
        %830 = vmatprep.subr.mxu0 0.0
        %831 = vmatpush1.msra.mxu0 0.0
        %832 = vmatprep.subr.mxu0 0.0
        %833 = vmatpush1.msra.mxu0 0.0
        %834 = vmatprep.subr.mxu0 0.0
        %835 = vmatpush1.msra.mxu0 0.0
        %836 = vmatprep.subr.mxu0 0.0
        %837 = vmatpush1.msra.mxu0 0.0
        %838 = vmatprep.subr.mxu0 0.0
        %839 = vmatpush1.msra.mxu0 0.0
        %840 = vmatprep.subr.mxu0 0.0
        %841 = vmatpush1.msra.mxu0 0.0
        %842 = vmatprep.subr.mxu0 0.0
        %843 = vmatpush1.msra.mxu0 0.0
        %844 = vmatprep.subr.mxu0 0.0
        %845 = vmatpush1.msra.mxu0 0.0
        %846 = vmatprep.subr.mxu0 0.0
        %847 = vmatpush1.msra.mxu0 0.0
        %848 = vmatprep.subr.mxu0 0.0
        %849 = vmatpush1.msra.mxu0 0.0
        %850 = vmatprep.mubr.f32.mxu0 0.0
        %851 = vmatmul.mubr.f32.gmra.mrb[0].mxu0 %v784
        %v852 = vpop.f32.mrb[0].mxu0
        %v853 = vadd.f32 0.0, %v852
        %v854 = vpop.f32.mrb[0].mxu0
        %855 = vdwg.mxu0
        %v856 = vld [vmem:[%s1 + $0x10] sm:$0xff]
        %v858 = vsel %vm216, %v853, 0
        %860 = vmatprep.subr.mxu0 0.0
        %861 = vmatpush1.msra.mxu0 %v856
        %862 = vmatprep.subr.mxu0 0.0
        %863 = vmatpush1.msra.mxu0 0.0
        %864 = vmatprep.subr.mxu0 0.0
        %865 = vmatpush1.msra.mxu0 0.0
        %866 = vmatprep.subr.mxu0 0.0
        %867 = vmatpush1.msra.mxu0 0.0
        %868 = vmatprep.subr.mxu0 0.0
        %869 = vmatpush1.msra.mxu0 0.0
        %870 = vmatprep.subr.mxu0 0.0
        %871 = vmatpush1.msra.mxu0 0.0
        %872 = vmatprep.subr.mxu0 0.0
        %873 = vmatpush1.msra.mxu0 0.0
        %874 = vmatprep.subr.mxu0 0.0
        %875 = vmatpush1.msra.mxu0 0.0
        %876 = vmatprep.subr.mxu0 0.0
        %877 = vmatpush1.msra.mxu0 0.0
        %878 = vmatprep.subr.mxu0 0.0
        %879 = vmatpush1.msra.mxu0 0.0
        %880 = vmatprep.subr.mxu0 0.0
        %881 = vmatpush1.msra.mxu0 0.0
        %882 = vmatprep.subr.mxu0 0.0
        %883 = vmatpush1.msra.mxu0 0.0
        %884 = vmatprep.subr.mxu0 0.0
        %885 = vmatpush1.msra.mxu0 0.0
        %886 = vmatprep.subr.mxu0 0.0
        %887 = vmatpush1.msra.mxu0 0.0
        %888 = vmatprep.subr.mxu0 0.0
        %889 = vmatpush1.msra.mxu0 0.0
        %890 = vmatprep.subr.mxu0 0.0
        %891 = vmatpush1.msra.mxu0 0.0
        %892 = vmatprep.subr.mxu0 0.0
        %893 = vmatpush1.msra.mxu0 0.0
        %894 = vmatprep.subr.mxu0 0.0
        %895 = vmatpush1.msra.mxu0 0.0
        %896 = vmatprep.subr.mxu0 0.0
        %897 = vmatpush1.msra.mxu0 0.0
        %898 = vmatprep.subr.mxu0 0.0
        %899 = vmatpush1.msra.mxu0 0.0
        %900 = vmatprep.subr.mxu0 0.0
        %901 = vmatpush1.msra.mxu0 0.0
        %902 = vmatprep.subr.mxu0 0.0
        %903 = vmatpush1.msra.mxu0 0.0
        %904 = vmatprep.subr.mxu0 0.0
        %905 = vmatpush1.msra.mxu0 0.0
        %906 = vmatprep.subr.mxu0 0.0
        %907 = vmatpush1.msra.mxu0 0.0
        %908 = vmatprep.subr.mxu0 0.0
        %909 = vmatpush1.msra.mxu0 0.0
        %910 = vmatprep.subr.mxu0 0.0
        %911 = vmatpush1.msra.mxu0 0.0
        %912 = vmatprep.subr.mxu0 0.0
        %913 = vmatpush1.msra.mxu0 0.0
        %914 = vmatprep.subr.mxu0 0.0
        %915 = vmatpush1.msra.mxu0 0.0
        %916 = vmatprep.subr.mxu0 0.0
        %917 = vmatpush1.msra.mxu0 0.0
        %918 = vmatprep.subr.mxu0 0.0
        %919 = vmatpush1.msra.mxu0 0.0
        %920 = vmatprep.subr.mxu0 0.0
        %921 = vmatpush1.msra.mxu0 0.0
        %922 = vmatprep.subr.mxu0 0.0
        %923 = vmatpush1.msra.mxu0 0.0
        %924 = vmatprep.mubr.f32.mxu0 0.0
        %925 = vmatmul.mubr.f32.gmra.mrb[0].mxu0 %v858
        %v926 = vpop.f32.mrb[0].mxu0
        %v927 = vadd.f32 0.0, %v926
        %v928 = vpop.f32.mrb[0].mxu0
        %929 = vdwg.mxu0
        %v930 = vadd.f32 %v688, %v927
        %931 = vrot.lane.b32.xlu0 %v211, 104
        %v932 = vpop.permute.xlu0 %931
        %933 = vrot.lane.b32.xlu0 %v213, 104
        %v934 = vpop.permute.xlu0 %933
        %v935 = vsel %vm216, %v932, 0
        %v937 = vsel %vm216, %v934, 0
        %939 = vmatprep.subr.mxu0 0.0
        %940 = vmatpush1.xpose.msra.mxu0 %v937
        %941 = vmatprep.subr.mxu0 0.0
        %942 = vmatpush1.xpose.msra.mxu0 0.0
        %943 = vmatprep.subr.mxu0 0.0
        %944 = vmatpush1.xpose.msra.mxu0 0.0
        %945 = vmatprep.subr.mxu0 0.0
        %946 = vmatpush1.xpose.msra.mxu0 0.0
        %947 = vmatprep.subr.mxu0 0.0
        %948 = vmatpush1.xpose.msra.mxu0 0.0
        %949 = vmatprep.subr.mxu0 0.0
        %950 = vmatpush1.xpose.msra.mxu0 0.0
        %951 = vmatprep.subr.mxu0 0.0
        %952 = vmatpush1.xpose.msra.mxu0 0.0
        %953 = vmatprep.subr.mxu0 0.0
        %954 = vmatpush1.xpose.msra.mxu0 0.0
        %955 = vmatprep.subr.mxu0 0.0
        %956 = vmatpush1.xpose.msra.mxu0 0.0
        %957 = vmatprep.subr.mxu0 0.0
        %958 = vmatpush1.xpose.msra.mxu0 0.0
        %959 = vmatprep.subr.mxu0 0.0
        %960 = vmatpush1.xpose.msra.mxu0 0.0
        %961 = vmatprep.subr.mxu0 0.0
        %962 = vmatpush1.xpose.msra.mxu0 0.0
        %963 = vmatprep.subr.mxu0 0.0
        %964 = vmatpush1.xpose.msra.mxu0 0.0
        %965 = vmatprep.subr.mxu0 0.0
        %966 = vmatpush1.xpose.msra.mxu0 0.0
        %967 = vmatprep.subr.mxu0 0.0
        %968 = vmatpush1.xpose.msra.mxu0 0.0
        %969 = vmatprep.subr.mxu0 0.0
        %970 = vmatpush1.xpose.msra.mxu0 0.0
        %971 = vmatprep.subr.mxu0 0.0
        %972 = vmatpush1.xpose.msra.mxu0 0.0
        %973 = vmatprep.subr.mxu0 0.0
        %974 = vmatpush1.xpose.msra.mxu0 0.0
        %975 = vmatprep.subr.mxu0 0.0
        %976 = vmatpush1.xpose.msra.mxu0 0.0
        %977 = vmatprep.subr.mxu0 0.0
        %978 = vmatpush1.xpose.msra.mxu0 0.0
        %979 = vmatprep.subr.mxu0 0.0
        %980 = vmatpush1.xpose.msra.mxu0 0.0
        %981 = vmatprep.subr.mxu0 0.0
        %982 = vmatpush1.xpose.msra.mxu0 0.0
        %983 = vmatprep.subr.mxu0 0.0
        %984 = vmatpush1.xpose.msra.mxu0 0.0
        %985 = vmatprep.subr.mxu0 0.0
        %986 = vmatpush1.xpose.msra.mxu0 0.0
        %987 = vmatprep.subr.mxu0 0.0
        %988 = vmatpush1.xpose.msra.mxu0 0.0
        %989 = vmatprep.subr.mxu0 0.0
        %990 = vmatpush1.xpose.msra.mxu0 0.0
        %991 = vmatprep.subr.mxu0 0.0
        %992 = vmatpush1.xpose.msra.mxu0 0.0
        %993 = vmatprep.subr.mxu0 0.0
        %994 = vmatpush1.xpose.msra.mxu0 0.0
        %995 = vmatprep.subr.mxu0 0.0
        %996 = vmatpush1.xpose.msra.mxu0 0.0
        %997 = vmatprep.subr.mxu0 0.0
        %998 = vmatpush1.xpose.msra.mxu0 0.0
        %999 = vmatprep.subr.mxu0 0.0
        %1000 = vmatpush1.xpose.msra.mxu0 0.0
        %1001 = vmatprep.subr.mxu0 0.0
        %1002 = vmatpush1.xpose.msra.mxu0 0.0
        %1003 = vmatprep.mubr.f32.mxu0 0.0
        %1004 = vmatmul.mubr.f32.gmra.mrb[0].mxu0 %v935
        %v1005 = vpop.f32.mrb[0].mxu0
        %v1006 = vadd.f32 0.0, %v1005
        %v1007 = vpop.f32.mrb[0].mxu0
        %1008 = vdwg.mxu0
        %v1009 = vsel %vm216, %v1006, -inf
        %1010 = vmax.xlane.f32.xlu0 %v1009
        %v1011 = vpop.xlane.xlu0 %1010
        %v1012 = vsub.f32 %v1006, %v1011
        %v1013 = vmul.f32 %v1012, 1.442695
        %v1014 = vpow.pop %v1013
        %v1015 = vsel %vm216, %v1014, 0.0
        %1016 = vadd.xlane.f32.xlu0 %v1015
        %v1017 = vpop.xlane.xlu0 %1016
        %v1018 = vrcp.pop %v1017
        %v1019 = vmul.f32 %v1014, %v1018
        %1020 = vrot.lane.b32.xlu0 %v215, 104
        %v1021 = vpop.permute.xlu0 %1020
        %v1024 = vsel %vm216, %v1019, 0
        %1026 = vmatprep.subr.mxu0 0.0
        %1027 = vmatpush1.msra.mxu0 %v1021
        %1028 = vmatprep.subr.mxu0 0.0
        %1029 = vmatpush1.msra.mxu0 0.0
        %1030 = vmatprep.subr.mxu0 0.0
        %1031 = vmatpush1.msra.mxu0 0.0
        %1032 = vmatprep.subr.mxu0 0.0
        %1033 = vmatpush1.msra.mxu0 0.0
        %1034 = vmatprep.subr.mxu0 0.0
        %1035 = vmatpush1.msra.mxu0 0.0
        %1036 = vmatprep.subr.mxu0 0.0
        %1037 = vmatpush1.msra.mxu0 0.0
        %1038 = vmatprep.subr.mxu0 0.0
        %1039 = vmatpush1.msra.mxu0 0.0
        %1040 = vmatprep.subr.mxu0 0.0
        %1041 = vmatpush1.msra.mxu0 0.0
        %1042 = vmatprep.subr.mxu0 0.0
        %1043 = vmatpush1.msra.mxu0 0.0
        %1044 = vmatprep.subr.mxu0 0.0
        %1045 = vmatpush1.msra.mxu0 0.0
        %1046 = vmatprep.subr.mxu0 0.0
        %1047 = vmatpush1.msra.mxu0 0.0
        %1048 = vmatprep.subr.mxu0 0.0
        %1049 = vmatpush1.msra.mxu0 0.0
        %1050 = vmatprep.subr.mxu0 0.0
        %1051 = vmatpush1.msra.mxu0 0.0
        %1052 = vmatprep.subr.mxu0 0.0
        %1053 = vmatpush1.msra.mxu0 0.0
        %1054 = vmatprep.subr.mxu0 0.0
        %1055 = vmatpush1.msra.mxu0 0.0
        %1056 = vmatprep.subr.mxu0 0.0
        %1057 = vmatpush1.msra.mxu0 0.0
        %1058 = vmatprep.subr.mxu0 0.0
        %1059 = vmatpush1.msra.mxu0 0.0
        %1060 = vmatprep.subr.mxu0 0.0
        %1061 = vmatpush1.msra.mxu0 0.0
        %1062 = vmatprep.subr.mxu0 0.0
        %1063 = vmatpush1.msra.mxu0 0.0
        %1064 = vmatprep.subr.mxu0 0.0
        %1065 = vmatpush1.msra.mxu0 0.0
        %1066 = vmatprep.subr.mxu0 0.0
        %1067 = vmatpush1.msra.mxu0 0.0
        %1068 = vmatprep.subr.mxu0 0.0
        %1069 = vmatpush1.msra.mxu0 0.0
        %1070 = vmatprep.subr.mxu0 0.0
        %1071 = vmatpush1.msra.mxu0 0.0
        %1072 = vmatprep.subr.mxu0 0.0
        %1073 = vmatpush1.msra.mxu0 0.0
        %1074 = vmatprep.subr.mxu0 0.0
        %1075 = vmatpush1.msra.mxu0 0.0
        %1076 = vmatprep.subr.mxu0 0.0
        %1077 = vmatpush1.msra.mxu0 0.0
        %1078 = vmatprep.subr.mxu0 0.0
        %1079 = vmatpush1.msra.mxu0 0.0
        %1080 = vmatprep.subr.mxu0 0.0
        %1081 = vmatpush1.msra.mxu0 0.0
        %1082 = vmatprep.subr.mxu0 0.0
        %1083 = vmatpush1.msra.mxu0 0.0
        %1084 = vmatprep.subr.mxu0 0.0
        %1085 = vmatpush1.msra.mxu0 0.0
        %1086 = vmatprep.subr.mxu0 0.0
        %1087 = vmatpush1.msra.mxu0 0.0
        %1088 = vmatprep.subr.mxu0 0.0
        %1089 = vmatpush1.msra.mxu0 0.0
        %1090 = vmatprep.mubr.f32.mxu0 0.0
        %1091 = vmatmul.mubr.f32.gmra.mrb[0].mxu0 %v1024
        %v1092 = vpop.f32.mrb[0].mxu0
        %v1093 = vadd.f32 0.0, %v1092
        %v1094 = vpop.f32.mrb[0].mxu0
        %1095 = vdwg.mxu0
        %v1096 = vld [vmem:[%s1 + $0x18] sm:$0xff]
        %v1098 = vsel %vm216, %v1093, 0
        %1100 = vmatprep.subr.mxu0 0.0
        %1101 = vmatpush1.msra.mxu0 %v1096
        %1102 = vmatprep.subr.mxu0 0.0
        %1103 = vmatpush1.msra.mxu0 0.0
        %1104 = vmatprep.subr.mxu0 0.0
        %1105 = vmatpush1.msra.mxu0 0.0
        %1106 = vmatprep.subr.mxu0 0.0
        %1107 = vmatpush1.msra.mxu0 0.0
        %1108 = vmatprep.subr.mxu0 0.0
        %1109 = vmatpush1.msra.mxu0 0.0
        %1110 = vmatprep.subr.mxu0 0.0
        %1111 = vmatpush1.msra.mxu0 0.0
        %1112 = vmatprep.subr.mxu0 0.0
        %1113 = vmatpush1.msra.mxu0 0.0
        %1114 = vmatprep.subr.mxu0 0.0
        %1115 = vmatpush1.msra.mxu0 0.0
        %1116 = vmatprep.subr.mxu0 0.0
        %1117 = vmatpush1.msra.mxu0 0.0
        %1118 = vmatprep.subr.mxu0 0.0
        %1119 = vmatpush1.msra.mxu0 0.0
        %1120 = vmatprep.subr.mxu0 0.0
        %1121 = vmatpush1.msra.mxu0 0.0
        %1122 = vmatprep.subr.mxu0 0.0
        %1123 = vmatpush1.msra.mxu0 0.0
        %1124 = vmatprep.subr.mxu0 0.0
        %1125 = vmatpush1.msra.mxu0 0.0
        %1126 = vmatprep.subr.mxu0 0.0
        %1127 = vmatpush1.msra.mxu0 0.0
        %1128 = vmatprep.subr.mxu0 0.0
        %1129 = vmatpush1.msra.mxu0 0.0
        %1130 = vmatprep.subr.mxu0 0.0
        %1131 = vmatpush1.msra.mxu0 0.0
        %1132 = vmatprep.subr.mxu0 0.0
        %1133 = vmatpush1.msra.mxu0 0.0
        %1134 = vmatprep.subr.mxu0 0.0
        %1135 = vmatpush1.msra.mxu0 0.0
        %1136 = vmatprep.subr.mxu0 0.0
        %1137 = vmatpush1.msra.mxu0 0.0
        %1138 = vmatprep.subr.mxu0 0.0
        %1139 = vmatpush1.msra.mxu0 0.0
        %1140 = vmatprep.subr.mxu0 0.0
        %1141 = vmatpush1.msra.mxu0 0.0
        %1142 = vmatprep.subr.mxu0 0.0
        %1143 = vmatpush1.msra.mxu0 0.0
        %1144 = vmatprep.subr.mxu0 0.0
        %1145 = vmatpush1.msra.mxu0 0.0
        %1146 = vmatprep.subr.mxu0 0.0
        %1147 = vmatpush1.msra.mxu0 0.0
        %1148 = vmatprep.subr.mxu0 0.0
        %1149 = vmatpush1.msra.mxu0 0.0
        %1150 = vmatprep.subr.mxu0 0.0
        %1151 = vmatpush1.msra.mxu0 0.0
        %1152 = vmatprep.subr.mxu0 0.0
        %1153 = vmatpush1.msra.mxu0 0.0
        %1154 = vmatprep.subr.mxu0 0.0
        %1155 = vmatpush1.msra.mxu0 0.0
        %1156 = vmatprep.subr.mxu0 0.0
        %1157 = vmatpush1.msra.mxu0 0.0
        %1158 = vmatprep.subr.mxu0 0.0
        %1159 = vmatpush1.msra.mxu0 0.0
        %1160 = vmatprep.subr.mxu0 0.0
        %1161 = vmatpush1.msra.mxu0 0.0
        %1162 = vmatprep.subr.mxu0 0.0
        %1163 = vmatpush1.msra.mxu0 0.0
        %1164 = vmatprep.mubr.f32.mxu0 0.0
        %1165 = vmatmul.mubr.f32.gmra.mrb[0].mxu0 %v1098
        %v1166 = vpop.f32.mrb[0].mxu0
        %v1167 = vadd.f32 0.0, %v1166
        %v1168 = vpop.f32.mrb[0].mxu0
        %1169 = vdwg.mxu0
        %v1170 = vadd.f32 %v930, %v1167
        %v1171 = vmul.f32 %v1170, 0.17677669
        %v1172 = vld [vmem:[%s2] sm:$0x1]
        %v1174 = vlaneseq
        %v1175 = vshrl.u32 %v1174, 7
        %v1176 = vsub.s32 0, %v1175
        %v1177 = vrot.slane %v1172, %v1176
        %v1179 = vadd.f32 %v1171, %v1177
        %vm1180 = vcmask 261120
        %1181 = vst.msk [vmem:[%s210] sm:$0xff] %vm1180, %v1179
        %s1182 = sand.u32 %s93, 1
        %s1183 = scalar_lea.sflag [#allocation4], %s1182
        %s1184 = sand.u32 %s93, 1
        %s1185 = smul.addr %s1184, 8
        %s1186 = scalar_lea.vmem [#allocation3], %s1185
        // Predicated region
        $region71: #{multi_head_attention.3} parent=65 // pred_check
          %p1187 = pneg %p103
        $region72: #{multi_head_attention.3} parent=65 // pred_check_branch
          %1189 = sbr.rel (%p1187) target = $region74
        $region73: #{multi_head_attention.3} parent=65 // pred_region
          %s1191 = ssub.s32 128, 128
          %1192 = vsyncadd %s1183, %s1191
          %s1193 = smul.addr %s17, 128
          %s1194 = scalar_lea.hbm %s3, %s1193
          %s1196 = sshll.u32 %s1186, 4
          %s1197 = int_to_ptr.vmem [resolvable:$true] %s1196
          %1199 = dma.vmem_to_hbm [thread:$0]  %s1197, 128, %s1194, %s1183
        $region74: #{multi_head_attention.3} parent=65 // pred_fallthru
          _
      $region66: #{multi_head_attention.3} parent=5 // pred_fallthru
        _
      %p1200 = scmp.le.s32.totalorder 2, %s12
      // Predicated region
      $region75: #{multi_head_attention.3} parent=5 // pred_check
        %p1201 = pneg %p1200
      $region76: #{multi_head_attention.3} parent=5 // pred_check_branch
        %1203 = sbr.rel (%p1201) target = $region78
      $region77: #{multi_head_attention.3} parent=5 // pred_region
        %s1204 = ssub.s32 %s12, 2
        // Predicated region
        $region79: #{multi_head_attention.3} parent=77 // pred_check
          %p1205 = pneg %p109
        $region80: #{multi_head_attention.3} parent=77 // pred_check_branch
          %1207 = sbr.rel (%p1205) target = $region82
        $region81: #{multi_head_attention.3} parent=77 // pred_region
          %s1208 = sand.u32 %s94, 1
          %s1209 = scalar_lea.sflag [#allocation4], %s1208
          %s1210 = sand.u32 %s94, 1
          %s1211 = smul.addr %s1210, 8
          %s1212 = scalar_lea.vmem [#allocation3], %s1211
          %1213 = dma.done %s1209, 128
        $region82: #{multi_head_attention.3} parent=77 // pred_fallthru
          _
      $region78: #{multi_head_attention.3} parent=5 // pred_fallthru
        _
    $region6: #{multi_head_attention.3} parent=1 // loop_footer
      %s16 = sadd.s32 1, %s12
    $region7: #{multi_head_attention.3} parent=1 // loop_footer_branch
      %11 = sbr.rel target = $region3
    $region8: #{multi_head_attention.3} parent=1 // loop_exit
      _
    %1214 = vsyncpa [#allocation4], 1
    %s1215 = scalar_lea.sflag [#allocation4], 1
    %1216 = vsyncpa %s1215, 1

</llo_original>
